<compile_context>
chip_gen: v5e
topology: v5e:2x2
jax: 0.10.0
libtpu: 0.0.40
codegen_flags: <defaults>
</compile_context>

<pallas_src>
import jax
import jax.numpy as jnp
from jax.experimental import pallas as pl
from jax.experimental.pallas import tpu as pltpu

EPS = 1e-5
LANE = 128


def _round_up(x, m):
    return (x + m - 1) // m * m


# --------------------------------------------------------------------------- kernels
def _make_conv_kernel(act_input):
    """3x3 'same' conv over one (batch, H row-band).

    Refs:
      xm_ref   : (1, TH, W, C)   main input band
      xt_ref   : (1, 1,  W, C)   row above the band (masked to 0 for the first band)
      xb_ref   : (1, 1,  W, C)   row below the band (masked to 0 for the last band)
      w_ref    : (9, C, Kp)      packed weight, tap-major (ki*3+kj)
      s_ref    : (1, C)          input-BN scale (ignored if act_input=False)
      t_ref    : (1, C)          input-BN shift
      y_ref    : (1, TH, W, Kp)  raw conv output band (pre-BN), compute_dtype
      stats_ref: (1, 1, 2, Kp)   fused per-band [sum, sum_sq] of the conv output (f32)
      band_ref : (TH+2, W+2, C)  VMEM scratch: activated, zero-halo band, compute_dtype
    """

    def kernel(xm_ref, xt_ref, xb_ref, w_ref, s_ref, t_ref, y_ref, stats_ref, band_ref):
        TH, W, C = xm_ref.shape[1], xm_ref.shape[2], xm_ref.shape[3]
        Kp = y_ref.shape[-1]
        cdt = band_ref.dtype
        t = pl.program_id(1)
        nb = pl.num_programs(1)

        if act_input:
            scale = s_ref[...]                        # (1, C) broadcast over lanes
            shift = t_ref[...]

            def act(v):                               # BN-affine + ReLU of previous layer
                return jnp.maximum(v.astype(jnp.float32) * scale + shift, 0.0)
        else:
            def act(v):                               # first conv: raw input, no act
                return v.astype(jnp.float32)

        # ---- assemble activated, zero-halo band (halo columns + masked halo rows) --
        zero_col = jnp.zeros((TH + 2, 1, C), cdt)
        band_ref[:, 0:1, :] = zero_col                # left conv-halo column
        band_ref[:, W + 1:W + 2, :] = zero_col        # right conv-halo column

        band_ref[1:TH + 1, 1:W + 1, :] = act(xm_ref[0]).astype(cdt)

        top_m = jnp.where(t > 0, 1.0, 0.0)            # zero halo above the first band
        band_ref[0:1, 1:W + 1, :] = (act(xt_ref[0]) * top_m).astype(cdt)
        bot_m = jnp.where(t < nb - 1, 1.0, 0.0)       # zero halo below the last band
        band_ref[TH + 1:TH + 2, 1:W + 1, :] = (act(xb_ref[0]) * bot_m).astype(cdt)

        # ---- 9 accumulated K=C matmuls straight from the band scratch (f32 acc) ----
        acc = jnp.zeros((TH * W, Kp), jnp.float32)
        for k in range(9):
            ki, kj = divmod(k, 3)
            lhs = band_ref[ki:ki + TH, kj:kj + W, :].reshape(TH * W, C)
            acc = acc + jnp.dot(lhs, w_ref[k], preferred_element_type=jnp.float32)

        # ---- fused BatchNorm partial statistics (single pass over the f32 acc) -----
        stats_ref[0, 0, 0:1, :] = jnp.sum(acc, axis=0, keepdims=True)
        stats_ref[0, 0, 1:2, :] = jnp.sum(acc * acc, axis=0, keepdims=True)

        y_ref[...] = acc.reshape(1, TH, W, Kp).astype(y_ref.dtype)

    return kernel


def _bn_relu_kernel(y_ref, s_ref, t_ref, o_ref):
    """Final BN2-affine + ReLU; channel un-pad folded into the output block."""
    cout = o_ref.shape[-1]
    v = y_ref[0][..., :cout].astype(jnp.float32)              # (TH, W, Cout)
    o_ref[0] = jnp.maximum(v * s_ref[...] + t_ref[...], 0.0)


# --------------------------------------------------------------------------- wrappers
def _conv_call(x, w_packed, scale, shift, *, act_input, th, out_dtype, vmem_limit_bytes):
    B, H, W, C = x.shape
    Kp = w_packed.shape[-1]
    nb = H // th

    main_map = lambda b, t: (b, t, 0, 0)
    top_map = lambda b, t: (b, jnp.maximum(t * th - 1, 0), 0, 0)     # row above band
    bot_map = lambda b, t: (b, jnp.minimum(t * th + th, H - 1), 0, 0)  # row below band

    out_isz = jnp.dtype(out_dtype).itemsize
    flops = 2 * B * H * W * 9 * C * Kp
    bytes_accessed = int(B * H * W * C * x.dtype.itemsize
                         + B * H * W * Kp * out_isz
                         + B * nb * int(w_packed.size) * out_isz
                         + B * nb * 2 * Kp * 4)

    return pl.pallas_call(
        _make_conv_kernel(act_input),
        out_shape=(jax.ShapeDtypeStruct((B, H, W, Kp), out_dtype),
                   jax.ShapeDtypeStruct((B, nb, 2, Kp), jnp.float32)),
        grid=(B, nb),
        in_specs=[
            pl.BlockSpec((1, th, W, C), main_map),
            pl.BlockSpec((1, 1, W, C), top_map),
            pl.BlockSpec((1, 1, W, C), bot_map),
            pl.BlockSpec((9, C, Kp), lambda b, t: (0, 0, 0)),   # packed weight
            pl.BlockSpec((1, C), lambda b, t: (0, 0)),
            pl.BlockSpec((1, C), lambda b, t: (0, 0)),
        ],
        out_specs=(
            pl.BlockSpec((1, th, W, Kp), lambda b, t: (b, t, 0, 0)),
            pl.BlockSpec((1, 1, 2, Kp), lambda b, t: (b, t, 0, 0)),
        ),
        scratch_shapes=[pltpu.VMEM((th + 2, W + 2, C), out_dtype)],
        compiler_params=pltpu.CompilerParams(
            dimension_semantics=("parallel", "parallel"),
            vmem_limit_bytes=vmem_limit_bytes),
        cost_estimate=pl.CostEstimate(flops=flops, transcendentals=0,
                                      bytes_accessed=bytes_accessed),
    )(x, x, x, w_packed, scale, shift)


def _bn_relu_call(y, scale, shift, cout, *, th, vmem_limit_bytes):
    B, H, W, Kp = y.shape
    nb = H // th
    return pl.pallas_call(
        _bn_relu_kernel,
        out_shape=jax.ShapeDtypeStruct((B, H, W, cout), jnp.float32),
        grid=(B, nb),
        in_specs=[
            pl.BlockSpec((1, th, W, Kp), lambda b, t: (b, t, 0, 0)),
            pl.BlockSpec((1, cout), lambda b, t: (0, 0)),
            pl.BlockSpec((1, cout), lambda b, t: (0, 0)),
        ],
        out_specs=pl.BlockSpec((1, th, W, cout), lambda b, t: (b, t, 0, 0)),
        compiler_params=pltpu.CompilerParams(
            dimension_semantics=("parallel", "parallel"),
            vmem_limit_bytes=vmem_limit_bytes),
    )(y, scale, shift)


def _pack_weight(w_oihw, cin_pad, cout_pad):
    """OIHW -> (9, cin_pad, cout_pad), tap-major rows (ki*3+kj), zero-padded channels."""
    cout, cin = w_oihw.shape[0], w_oihw.shape[1]
    w = jnp.transpose(w_oihw, (2, 3, 1, 0)).astype(jnp.float32)   # (3, 3, cin, cout)
    w = jnp.pad(w, ((0, 0), (0, 0), (0, cin_pad - cin), (0, cout_pad - cout)))
    return w.reshape(9, cin_pad, cout_pad)


def _pad_vec(v, n):
    return jnp.pad(v.astype(jnp.float32), (0, n - v.shape[0]))


def _stats_to_scale_shift(stats, gamma_p, beta_p, count):
    """Combine per-band [sum, sumsq] partials into BN scale/shift (biased batch var)."""
    total = jnp.sum(stats, axis=(0, 1))                 # (2, Kp)
    mean = total[0] / count
    var = jnp.maximum(total[1] / count - mean * mean, 0.0)
    scale = gamma_p * jax.lax.rsqrt(var + EPS)
    shift = beta_p - mean * scale
    return scale.reshape(1, -1), shift.reshape(1, -1)


def _pick_band_rows(H, W, c_in, k_out, in_isz, cdt_isz, max_rows, budget_bytes):
    """Largest divisor of H (<= max_rows) whose per-step VMEM footprint fits the budget."""
    best = 1
    for th in range(1, min(H, max_rows) + 1):
        if H % th:
            continue
        need = (2 * th * W * c_in * in_isz               # main input block, double-buffered
                + 4 * W * c_in * in_isz                  # two halo-row blocks, double-buffered
                + 2 * th * W * k_out * cdt_isz           # conv output block, double-buffered
                + 2 * 2 * k_out * 4                      # stats block
                + (th + 2) * (W + 2) * c_in * cdt_isz    # halo-assembled band scratch
                + 2 * 9 * c_in * k_out * cdt_isz         # packed weight (double-buffered)
                + th * W * k_out * 4                     # f32 accumulator
                + th * W * c_in * cdt_isz)               # one tap lhs temp
        if need <= budget_bytes:
            best = th
    return best


def double_conv(x_nchw, w1_oihw, g1, b1, w2_oihw, g2, b2, *,
                compute_dtype=jnp.bfloat16, row_band=32,
                vmem_limit_bytes=48 * 1024 * 1024):
    """Pallas DoubleConv (training-mode BN). x: (B, Cin, H, W) f32 -> (B, Cout, H, W)."""
    B, Cin, H, W = x_nchw.shape
    Cout = w1_oihw.shape[0]
    Kp = _round_up(Cout, LANE)                 # lane-dense conv-output channels
    count = float(B * H * W)
    cdt = compute_dtype
    cdt_isz = jnp.dtype(cdt).itemsize

    # Row-band size: divisor of H sized against conv2 (the heavier call) and the budget.
    th = _pick_band_rows(H, W, Kp, Kp, cdt_isz, cdt_isz, row_band,
                         budget_bytes=int(0.6 * vmem_limit_bytes))

    # NCHW -> NHWC.  conv1's input channels stay UNPADDED (no 32x HBM inflation).
    x = jnp.transpose(x_nchw, (0, 2, 3, 1)).astype(jnp.float32)

    w1p = _pack_weight(w1_oihw, Cin, Kp).astype(cdt)   # (9, Cin, Kp)
    w2p = _pack_weight(w2_oihw, Kp, Kp).astype(cdt)    # (9, Kp, Kp)
    g1p, b1p = _pad_vec(g1, Kp), _pad_vec(b1, Kp)      # padded gamma=0 -> padded act = 0
    g2p, b2p = _pad_vec(g2, Kp), _pad_vec(b2, Kp)

    one = jnp.ones((1, Cin), jnp.float32)
    zero = jnp.zeros((1, Cin), jnp.float32)

    # conv1 (+ fused per-band BN1 statistics)
    y1, st1 = _conv_call(x, w1p, one, zero, act_input=False, th=th,
                         out_dtype=cdt, vmem_limit_bytes=vmem_limit_bytes)
    s1, t1 = _stats_to_scale_shift(st1, g1p, b1p, count)

    # BN1 + ReLU fused into conv2's input path (+ fused per-band BN2 statistics)
    y2, st2 = _conv_call(y1, w2p, s1, t1, act_input=True, th=th,
                         out_dtype=cdt, vmem_limit_bytes=vmem_limit_bytes)
    s2, t2 = _stats_to_scale_shift(st2, g2p, b2p, count)

    # final BN2 + ReLU with the channel un-pad folded into the kernel output
    out = _bn_relu_call(y2, s2[:, :Cout], t2[:, :Cout], Cout, th=th,
                        vmem_limit_bytes=vmem_limit_bytes)     # (B, H, W, Cout) f32

    # NHWC -> NCHW left to XLA (see TODO: emit NCHW in-kernel when W % 128 == 0).
    return jnp.transpose(out, (0, 3, 1, 2))


def ref_double_conv(x_nchw, w1_oihw, g1, b1, w2_oihw, g2, b2):
    """Pure-JAX/XLA reference mirroring the PyTorch module (training-mode BN)."""
    def conv(x, w):
        return jax.lax.conv_general_dilated(
            x, w, window_strides=(1, 1), padding="SAME",
            dimension_numbers=("NCHW", "OIHW", "NCHW"))

    def bn_relu(y, g, b):
        mean = jnp.mean(y, axis=(0, 2, 3), keepdims=True)
        var = jnp.mean(jnp.square(y - mean), axis=(0, 2, 3), keepdims=True)
        yn = (y - mean) * jax.lax.rsqrt(var + EPS)
        yn = yn * g.reshape(1, -1, 1, 1) + b.reshape(1, -1, 1, 1)
        return jnp.maximum(yn, 0.0)

    y = bn_relu(conv(x_nchw, w1_oihw), g1, b1)
    return bn_relu(conv(y, w2_oihw), g2, b2)


if __name__ == "__main__":
    B, Cin, Cout, H, W = 2, 4, 8, 16, 16
    key = jax.random.PRNGKey(0)
    kx, kw1, kw2, kg1, kb1, kg2, kb2 = jax.random.split(key, 7)

    x = jax.random.normal(kx, (B, Cin, H, W), jnp.float32)
    # Conv2d(in, out, 3, padding=1, bias=False) weights: (Cout, Cin, 3, 3)
    w1 = jax.random.normal(kw1, (Cout, Cin, 3, 3), jnp.float32) * 0.2
    w2 = jax.random.normal(kw2, (Cout, Cout, 3, 3), jnp.float32) * 0.2
    # BatchNorm2d affine params (deterministic, non-trivial)
    g1 = 1.0 + 0.1 * jax.random.normal(kg1, (Cout,), jnp.float32)
    b1 = 0.1 * jax.random.normal(kb1, (Cout,), jnp.float32)
    g2 = 1.0 + 0.1 * jax.random.normal(kg2, (Cout,), jnp.float32)
    b2 = 0.1 * jax.random.normal(kb2, (Cout,), jnp.float32)

    ref = jax.block_until_ready(ref_double_conv(x, w1, g1, b1, w2, g2, b2))

    # Exact path (f32 MXU operands): tight check of the kernel logic.
    # row_band=8 so the toy size exercises multiple bands and the halo masking.
    out_f32 = jax.block_until_ready(
        double_conv(x, w1, g1, b1, w2, g2, b2,
                    compute_dtype=jnp.float32, row_band=8))
    assert out_f32.shape == (B, Cout, H, W) and out_f32.dtype == jnp.float32
    err_f32 = float(jnp.max(jnp.abs(out_f32 - ref)))
    assert err_f32 < 2e-3, f"f32 path mismatch vs reference: {err_f32}"

    # Performance path (bf16 MXU operands + bf16 intermediates, f32 accumulate/stats):
    # tolerance sized to the bf16 rounding budget of two stacked 3x3 convs + BN.
    out_bf16 = jax.block_until_ready(
        double_conv(x, w1, g1, b1, w2, g2, b2,
                    compute_dtype=jnp.bfloat16, row_band=8))
    assert out_bf16.shape == (B, Cout, H, W) and out_bf16.dtype == jnp.float32
    err_bf16 = float(jnp.max(jnp.abs(out_bf16 - ref)))
    assert err_bf16 < 5e-2, f"bf16 path mismatch vs reference: {err_bf16}"

    print("KERNEL_OK")
</pallas_src>

<mosaic_0001>
module attributes {stable_mosaic.version = 11 : i64} {
  func.func @kernel(%arg0: i32, %arg1: i32, %arg2: memref<1x8x16x4xf32, #tpu.memory_space<vmem>>, %arg3: memref<1x1x16x4xf32, #tpu.memory_space<vmem>>, %arg4: memref<1x1x16x4xf32, #tpu.memory_space<vmem>>, %arg5: memref<9x4x128xf32, #tpu.memory_space<vmem>>, %arg6: memref<1x4xf32, #tpu.memory_space<vmem>>, %arg7: memref<1x4xf32, #tpu.memory_space<vmem>>, %arg8: memref<1x8x16x128xf32, #tpu.memory_space<vmem>>, %arg9: memref<1x1x2x128xf32, #tpu.memory_space<vmem>>, %arg10: memref<10x18x4xf32, #tpu.memory_space<vmem>>) attributes {dimension_semantics = [#tpu.dimension_semantics<parallel>, #tpu.dimension_semantics<parallel>], iteration_bounds = array<i64: 2, 2>, scalar_prefetch = 0 : i64, scratch_operands = 1 : i64, tpu.core_type = #tpu.core_type<tc>, window_params = [{transform_indices = @transform_0, window_bounds = array<i64: 1, 8, 16, 4>}, {transform_indices = @transform_1, window_bounds = array<i64: 1, 1, 16, 4>}, {transform_indices = @transform_2, window_bounds = array<i64: 1, 1, 16, 4>}, {pipeline_mode = #tpu.pipeline_mode<synchronous>, transform_indices = @transform_3, window_bounds = array<i64: 9, 4, 128>}, {pipeline_mode = #tpu.pipeline_mode<synchronous>, transform_indices = @transform_4, window_bounds = array<i64: 1, 4>}, {pipeline_mode = #tpu.pipeline_mode<synchronous>, transform_indices = @transform_5, window_bounds = array<i64: 1, 4>}, {transform_indices = @transform_6, window_bounds = array<i64: 1, 8, 16, 128>}, {transform_indices = @transform_7, window_bounds = array<i64: 1, 1, 2, 128>}]} {
    %cst = arith.constant 0.000000e+00 : f32
    %0 = vector.broadcast %cst : f32 to vector<10x1x4xf32>
    %c0 = arith.constant 0 : index
    %c0_0 = arith.constant 0 : index
    %c0_1 = arith.constant 0 : index
    %1 = vector.load %arg10[%c0, %c0_0, %c0_1] : memref<10x18x4xf32, #tpu.memory_space<vmem>>, vector<10x1x4xf32>
    tpu.vector_store %arg10[%c0, %c0_0, %c0_1], %0 {strides = array<i32>} : memref<10x18x4xf32, #tpu.memory_space<vmem>>, vector<10x1x4xf32>,
    %c0_2 = arith.constant 0 : index
    %c17 = arith.constant 17 : index
    %c0_3 = arith.constant 0 : index
    %2 = vector.load %arg10[%c0_2, %c17, %c0_3] : memref<10x18x4xf32, #tpu.memory_space<vmem>>, vector<10x1x4xf32>
    tpu.vector_store %arg10[%c0_2, %c17, %c0_3], %0 {strides = array<i32>} : memref<10x18x4xf32, #tpu.memory_space<vmem>>, vector<10x1x4xf32>,
    %c0_4 = arith.constant 0 : index
    %c0_5 = arith.constant 0 : index
    %c0_6 = arith.constant 0 : index
    %c0_7 = arith.constant 0 : index
    %3 = vector.load %arg2[%c0_4, %c0_5, %c0_6, %c0_7] : memref<1x8x16x4xf32, #tpu.memory_space<vmem>>, vector<1x8x16x4xf32>
    %4 = vector.shape_cast %3 : vector<1x8x16x4xf32> to vector<8x16x4xf32>
    %c1 = arith.constant 1 : index
    %c1_8 = arith.constant 1 : index
    %c0_9 = arith.constant 0 : index
    %5 = vector.load %arg10[%c1, %c1_8, %c0_9] : memref<10x18x4xf32, #tpu.memory_space<vmem>>, vector<8x16x4xf32>
    tpu.vector_store %arg10[%c1, %c1_8, %c0_9], %4 {strides = array<i32>} : memref<10x18x4xf32, #tpu.memory_space<vmem>>, vector<8x16x4xf32>,
    %c0_i32 = arith.constant 0 : i32
    %6 = arith.cmpi sgt, %arg1, %c0_i32 : i32
    %cst_10 = arith.constant 1.000000e+00 : f32
    %cst_11 = arith.constant 0.000000e+00 : f32
    %7 = arith.select %6, %cst_10, %cst_11 : f32
    %c0_12 = arith.constant 0 : index
    %c0_13 = arith.constant 0 : index
    %c0_14 = arith.constant 0 : index
    %c0_15 = arith.constant 0 : index
    %8 = vector.load %arg3[%c0_12, %c0_13, %c0_14, %c0_15] : memref<1x1x16x4xf32, #tpu.memory_space<vmem>>, vector<1x1x16x4xf32>
    %9 = vector.shape_cast %8 : vector<1x1x16x4xf32> to vector<1x16x4xf32>
    %10 = vector.broadcast %7 : f32 to vector<1x16x4xf32>
    %11 = arith.mulf %9, %10 : vector<1x16x4xf32>
    %c0_16 = arith.constant 0 : index
    %c1_17 = arith.constant 1 : index
    %c0_18 = arith.constant 0 : index
    %12 = vector.load %arg10[%c0_16, %c1_17, %c0_18] : memref<10x18x4xf32, #tpu.memory_space<vmem>>, vector<1x16x4xf32>
    tpu.vector_store %arg10[%c0_16, %c1_17, %c0_18], %11 {strides = array<i32>} : memref<10x18x4xf32, #tpu.memory_space<vmem>>, vector<1x16x4xf32>,
    %c1_i32 = arith.constant 1 : i32
    %13 = arith.cmpi slt, %arg1, %c1_i32 : i32
    %cst_19 = arith.constant 1.000000e+00 : f32
    %cst_20 = arith.constant 0.000000e+00 : f32
    %14 = arith.select %13, %cst_19, %cst_20 : f32
    %c0_21 = arith.constant 0 : index
    %c0_22 = arith.constant 0 : index
    %c0_23 = arith.constant 0 : index
    %c0_24 = arith.constant 0 : index
    %15 = vector.load %arg4[%c0_21, %c0_22, %c0_23, %c0_24] : memref<1x1x16x4xf32, #tpu.memory_space<vmem>>, vector<1x1x16x4xf32>
    %16 = vector.shape_cast %15 : vector<1x1x16x4xf32> to vector<1x16x4xf32>
    %17 = vector.broadcast %14 : f32 to vector<1x16x4xf32>
    %18 = arith.mulf %16, %17 : vector<1x16x4xf32>
    %c9 = arith.constant 9 : index
    %c1_25 = arith.constant 1 : index
    %c0_26 = arith.constant 0 : index
    %19 = vector.load %arg10[%c9, %c1_25, %c0_26] : memref<10x18x4xf32, #tpu.memory_space<vmem>>, vector<1x16x4xf32>
    tpu.vector_store %arg10[%c9, %c1_25, %c0_26], %18 {strides = array<i32>} : memref<10x18x4xf32, #tpu.memory_space<vmem>>, vector<1x16x4xf32>,
    %cst_27 = arith.constant 0.000000e+00 : f32
    %20 = vector.broadcast %cst_27 : f32 to vector<128x128xf32>
    %c0_28 = arith.constant 0 : index
    %c0_29 = arith.constant 0 : index
    %c0_30 = arith.constant 0 : index
    %21 = vector.load %arg10[%c0_28, %c0_29, %c0_30] : memref<10x18x4xf32, #tpu.memory_space<vmem>>, vector<8x16x4xf32>
    %22 = vector.shape_cast %21 : vector<8x16x4xf32> to vector<128x4xf32>
    %c0_31 = arith.constant 0 : index
    %c0_32 = arith.constant 0 : index
    %c0_33 = arith.constant 0 : index
    %23 = vector.load %arg5[%c0_31, %c0_32, %c0_33] : memref<9x4x128xf32, #tpu.memory_space<vmem>>, vector<1x4x128xf32>
    %24 = vector.shape_cast %23 : vector<1x4x128xf32> to vector<4x128xf32>
    %cst_34 = arith.constant dense<0.000000e+00> : vector<128x128xf32>
    %25 = tpu.matmul %22, %24, %cst_34 {dimension_numbers = #tpu.dot_dimension_numbers<[1], [0], [0], [1], [0, 0, 1, 1], [], []>} : vector<128x4xf32>, vector<4x128xf32>, vector<128x128xf32> -> vector<128x128xf32>
    %26 = arith.addf %20, %25 : vector<128x128xf32>
    %c0_35 = arith.constant 0 : index
    %c1_36 = arith.constant 1 : index
    %c0_37 = arith.constant 0 : index
    %27 = vector.load %arg10[%c0_35, %c1_36, %c0_37] : memref<10x18x4xf32, #tpu.memory_space<vmem>>, vector<8x16x4xf32>
    %28 = vector.shape_cast %27 : vector<8x16x4xf32> to vector<128x4xf32>
    %c1_38 = arith.constant 1 : index
    %c0_39 = arith.constant 0 : index
    %c0_40 = arith.constant 0 : index
    %29 = vector.load %arg5[%c1_38, %c0_39, %c0_40] : memref<9x4x128xf32, #tpu.memory_space<vmem>>, vector<1x4x128xf32>
    %30 = vector.shape_cast %29 : vector<1x4x128xf32> to vector<4x128xf32>
    %cst_41 = arith.constant dense<0.000000e+00> : vector<128x128xf32>
    %31 = tpu.matmul %28, %30, %cst_41 {dimension_numbers = #tpu.dot_dimension_numbers<[1], [0], [0], [1], [0, 0, 1, 1], [], []>} : vector<128x4xf32>, vector<4x128xf32>, vector<128x128xf32> -> vector<128x128xf32>
    %32 = arith.addf %26, %31 : vector<128x128xf32>
    %c0_42 = arith.constant 0 : index
    %c2 = arith.constant 2 : index
    %c0_43 = arith.constant 0 : index
    %33 = vector.load %arg10[%c0_42, %c2, %c0_43] : memref<10x18x4xf32, #tpu.memory_space<vmem>>, vector<8x16x4xf32>
    %34 = vector.shape_cast %33 : vector<8x16x4xf32> to vector<128x4xf32>
    %c2_44 = arith.constant 2 : index
    %c0_45 = arith.constant 0 : index
    %c0_46 = arith.constant 0 : index
    %35 = vector.load %arg5[%c2_44, %c0_45, %c0_46] : memref<9x4x128xf32, #tpu.memory_space<vmem>>, vector<1x4x128xf32>
    %36 = vector.shape_cast %35 : vector<1x4x128xf32> to vector<4x128xf32>
    %cst_47 = arith.constant dense<0.000000e+00> : vector<128x128xf32>
    %37 = tpu.matmul %34, %36, %cst_47 {dimension_numbers = #tpu.dot_dimension_numbers<[1], [0], [0], [1], [0, 0, 1, 1], [], []>} : vector<128x4xf32>, vector<4x128xf32>, vector<128x128xf32> -> vector<128x128xf32>
    %38 = arith.addf %32, %37 : vector<128x128xf32>
    %c1_48 = arith.constant 1 : index
    %c0_49 = arith.constant 0 : index
    %c0_50 = arith.constant 0 : index
    %39 = vector.load %arg10[%c1_48, %c0_49, %c0_50] : memref<10x18x4xf32, #tpu.memory_space<vmem>>, vector<8x16x4xf32>
    %40 = vector.shape_cast %39 : vector<8x16x4xf32> to vector<128x4xf32>
    %c3 = arith.constant 3 : index
    %c0_51 = arith.constant 0 : index
    %c0_52 = arith.constant 0 : index
    %41 = vector.load %arg5[%c3, %c0_51, %c0_52] : memref<9x4x128xf32, #tpu.memory_space<vmem>>, vector<1x4x128xf32>
    %42 = vector.shape_cast %41 : vector<1x4x128xf32> to vector<4x128xf32>
    %cst_53 = arith.constant dense<0.000000e+00> : vector<128x128xf32>
    %43 = tpu.matmul %40, %42, %cst_53 {dimension_numbers = #tpu.dot_dimension_numbers<[1], [0], [0], [1], [0, 0, 1, 1], [], []>} : vector<128x4xf32>, vector<4x128xf32>, vector<128x128xf32> -> vector<128x128xf32>
    %44 = arith.addf %38, %43 : vector<128x128xf32>
    %c1_54 = arith.constant 1 : index
    %c1_55 = arith.constant 1 : index
    %c0_56 = arith.constant 0 : index
    %45 = vector.load %arg10[%c1_54, %c1_55, %c0_56] : memref<10x18x4xf32, #tpu.memory_space<vmem>>, vector<8x16x4xf32>
    %46 = vector.shape_cast %45 : vector<8x16x4xf32> to vector<128x4xf32>
    %c4 = arith.constant 4 : index
    %c0_57 = arith.constant 0 : index
    %c0_58 = arith.constant 0 : index
    %47 = vector.load %arg5[%c4, %c0_57, %c0_58] : memref<9x4x128xf32, #tpu.memory_space<vmem>>, vector<1x4x128xf32>
    %48 = vector.shape_cast %47 : vector<1x4x128xf32> to vector<4x128xf32>
    %cst_59 = arith.constant dense<0.000000e+00> : vector<128x128xf32>
    %49 = tpu.matmul %46, %48, %cst_59 {dimension_numbers = #tpu.dot_dimension_numbers<[1], [0], [0], [1], [0, 0, 1, 1], [], []>} : vector<128x4xf32>, vector<4x128xf32>, vector<128x128xf32> -> vector<128x128xf32>
    %50 = arith.addf %44, %49 : vector<128x128xf32>
    %c1_60 = arith.constant 1 : index
    %c2_61 = arith.constant 2 : index
    %c0_62 = arith.constant 0 : index
    %51 = vector.load %arg10[%c1_60, %c2_61, %c0_62] : memref<10x18x4xf32, #tpu.memory_space<vmem>>, vector<8x16x4xf32>
    %52 = vector.shape_cast %51 : vector<8x16x4xf32> to vector<128x4xf32>
    %c5 = arith.constant 5 : index
    %c0_63 = arith.constant 0 : index
    %c0_64 = arith.constant 0 : index
    %53 = vector.load %arg5[%c5, %c0_63, %c0_64] : memref<9x4x128xf32, #tpu.memory_space<vmem>>, vector<1x4x128xf32>
    %54 = vector.shape_cast %53 : vector<1x4x128xf32> to vector<4x128xf32>
    %cst_65 = arith.constant dense<0.000000e+00> : vector<128x128xf32>
    %55 = tpu.matmul %52, %54, %cst_65 {dimension_numbers = #tpu.dot_dimension_numbers<[1], [0], [0], [1], [0, 0, 1, 1], [], []>} : vector<128x4xf32>, vector<4x128xf32>, vector<128x128xf32> -> vector<128x128xf32>
    %56 = arith.addf %50, %55 : vector<128x128xf32>
    %c2_66 = arith.constant 2 : index
    %c0_67 = arith.constant 0 : index
    %c0_68 = arith.constant 0 : index
    %57 = vector.load %arg10[%c2_66, %c0_67, %c0_68] : memref<10x18x4xf32, #tpu.memory_space<vmem>>, vector<8x16x4xf32>
    %58 = vector.shape_cast %57 : vector<8x16x4xf32> to vector<128x4xf32>
    %c6 = arith.constant 6 : index
    %c0_69 = arith.constant 0 : index
    %c0_70 = arith.constant 0 : index
    %59 = vector.load %arg5[%c6, %c0_69, %c0_70] : memref<9x4x128xf32, #tpu.memory_space<vmem>>, vector<1x4x128xf32>
    %60 = vector.shape_cast %59 : vector<1x4x128xf32> to vector<4x128xf32>
    %cst_71 = arith.constant dense<0.000000e+00> : vector<128x128xf32>
    %61 = tpu.matmul %58, %60, %cst_71 {dimension_numbers = #tpu.dot_dimension_numbers<[1], [0], [0], [1], [0, 0, 1, 1], [], []>} : vector<128x4xf32>, vector<4x128xf32>, vector<128x128xf32> -> vector<128x128xf32>
    %62 = arith.addf %56, %61 : vector<128x128xf32>
    %c2_72 = arith.constant 2 : index
    %c1_73 = arith.constant 1 : index
    %c0_74 = arith.constant 0 : index
    %63 = vector.load %arg10[%c2_72, %c1_73, %c0_74] : memref<10x18x4xf32, #tpu.memory_space<vmem>>, vector<8x16x4xf32>
    %64 = vector.shape_cast %63 : vector<8x16x4xf32> to vector<128x4xf32>
    %c7 = arith.constant 7 : index
    %c0_75 = arith.constant 0 : index
    %c0_76 = arith.constant 0 : index
    %65 = vector.load %arg5[%c7, %c0_75, %c0_76] : memref<9x4x128xf32, #tpu.memory_space<vmem>>, vector<1x4x128xf32>
    %66 = vector.shape_cast %65 : vector<1x4x128xf32> to vector<4x128xf32>
    %cst_77 = arith.constant dense<0.000000e+00> : vector<128x128xf32>
    %67 = tpu.matmul %64, %66, %cst_77 {dimension_numbers = #tpu.dot_dimension_numbers<[1], [0], [0], [1], [0, 0, 1, 1], [], []>} : vector<128x4xf32>, vector<4x128xf32>, vector<128x128xf32> -> vector<128x128xf32>
    %68 = arith.addf %62, %67 : vector<128x128xf32>
    %c2_78 = arith.constant 2 : index
    %c2_79 = arith.constant 2 : index
    %c0_80 = arith.constant 0 : index
    %69 = vector.load %arg10[%c2_78, %c2_79, %c0_80] : memref<10x18x4xf32, #tpu.memory_space<vmem>>, vector<8x16x4xf32>
    %70 = vector.shape_cast %69 : vector<8x16x4xf32> to vector<128x4xf32>
    %c8 = arith.constant 8 : index
    %c0_81 = arith.constant 0 : index
    %c0_82 = arith.constant 0 : index
    %71 = vector.load %arg5[%c8, %c0_81, %c0_82] : memref<9x4x128xf32, #tpu.memory_space<vmem>>, vector<1x4x128xf32>
    %72 = vector.shape_cast %71 : vector<1x4x128xf32> to vector<4x128xf32>
    %cst_83 = arith.constant dense<0.000000e+00> : vector<128x128xf32>
    %73 = tpu.matmul %70, %72, %cst_83 {dimension_numbers = #tpu.dot_dimension_numbers<[1], [0], [0], [1], [0, 0, 1, 1], [], []>} : vector<128x4xf32>, vector<4x128xf32>, vector<128x128xf32> -> vector<128x128xf32>
    %74 = arith.addf %68, %73 : vector<128x128xf32>
    %cst_84 = arith.constant dense<0.000000e+00> : vector<128xf32>
    %75 = vector.multi_reduction <add>, %74, %cst_84 [0] : vector<128x128xf32> to vector<128xf32>
    %76 = vector.shape_cast %75 : vector<128xf32> to vector<1x128xf32>
    %c0_85 = arith.constant 0 : index
    %c0_86 = arith.constant 0 : index
    %c0_87 = arith.constant 0 : index
    %c0_88 = arith.constant 0 : index
    %77 = vector.load %arg9[%c0_85, %c0_86, %c0_87, %c0_88] : memref<1x1x2x128xf32, #tpu.memory_space<vmem>>, vector<1x1x1x128xf32>
    %78 = vector.shape_cast %77 : vector<1x1x1x128xf32> to vector<1x128xf32>
    %79 = vector.shape_cast %76 : vector<1x128xf32> to vector<1x1x1x128xf32>
    tpu.vector_store %arg9[%c0_85, %c0_86, %c0_87, %c0_88], %79 {strides = array<i32>} : memref<1x1x2x128xf32, #tpu.memory_space<vmem>>, vector<1x1x1x128xf32>,
    %80 = arith.mulf %74, %74 : vector<128x128xf32>
    %cst_89 = arith.constant dense<0.000000e+00> : vector<128xf32>
    %81 = vector.multi_reduction <add>, %80, %cst_89 [0] : vector<128x128xf32> to vector<128xf32>
    %82 = vector.shape_cast %81 : vector<128xf32> to vector<1x128xf32>
    %c0_90 = arith.constant 0 : index
    %c0_91 = arith.constant 0 : index
    %c1_92 = arith.constant 1 : index
    %c0_93 = arith.constant 0 : index
    %83 = vector.load %arg9[%c0_90, %c0_91, %c1_92, %c0_93] : memref<1x1x2x128xf32, #tpu.memory_space<vmem>>, vector<1x1x1x128xf32>
    %84 = vector.shape_cast %83 : vector<1x1x1x128xf32> to vector<1x128xf32>
    %85 = vector.shape_cast %82 : vector<1x128xf32> to vector<1x1x1x128xf32>
    tpu.vector_store %arg9[%c0_90, %c0_91, %c1_92, %c0_93], %85 {strides = array<i32>} : memref<1x1x2x128xf32, #tpu.memory_space<vmem>>, vector<1x1x1x128xf32>,
    %86 = vector.shape_cast %74 : vector<128x128xf32> to vector<1x8x16x128xf32>
    %c0_94 = arith.constant 0 : index
    %c0_95 = arith.constant 0 : index
    %c0_96 = arith.constant 0 : index
    %c0_97 = arith.constant 0 : index
    %87 = vector.load %arg8[%c0_94, %c0_95, %c0_96, %c0_97] : memref<1x8x16x128xf32, #tpu.memory_space<vmem>>, vector<1x8x16x128xf32>
    tpu.vector_store %arg8[%c0_94, %c0_95, %c0_96, %c0_97], %86 {strides = array<i32>} : memref<1x8x16x128xf32, #tpu.memory_space<vmem>>, vector<1x8x16x128xf32>,
    return
  }
  func.func @transform_0(%arg0: i32, %arg1: i32) -> (i32, i32, i32, i32) {
    %c0_i32 = arith.constant 0 : i32
    %c0_i32_0 = arith.constant 0 : i32
    %c0_i32_1 = arith.constant 0 : i32
    return %arg0, %arg1, %c0_i32, %c0_i32_0 : i32, i32, i32, i32
  }
  func.func @transform_1(%arg0: i32, %arg1: i32) -> (i32, i32, i32, i32) {
    %c8_i32 = arith.constant 8 : i32
    %0 = arith.muli %arg1, %c8_i32 : i32
    %c1_i32 = arith.constant 1 : i32
    %1 = arith.subi %0, %c1_i32 : i32
    %c0_i32 = arith.constant 0 : i32
    %2 = arith.maxsi %1, %c0_i32 : i32
    %c0_i32_0 = arith.constant 0 : i32
    %c0_i32_1 = arith.constant 0 : i32
    %c0_i32_2 = arith.constant 0 : i32
    return %arg0, %2, %c0_i32_0, %c0_i32_1 : i32, i32, i32, i32
  }
  func.func @transform_2(%arg0: i32, %arg1: i32) -> (i32, i32, i32, i32) {
    %c8_i32 = arith.constant 8 : i32
    %0 = arith.muli %arg1, %c8_i32 : i32
    %c8_i32_0 = arith.constant 8 : i32
    %1 = arith.addi %0, %c8_i32_0 : i32
    %c15_i32 = arith.constant 15 : i32
    %2 = arith.minsi %1, %c15_i32 : i32
    %c0_i32 = arith.constant 0 : i32
    %c0_i32_1 = arith.constant 0 : i32
    %c0_i32_2 = arith.constant 0 : i32
    return %arg0, %2, %c0_i32, %c0_i32_1 : i32, i32, i32, i32
  }
  func.func @transform_3(%arg0: i32, %arg1: i32) -> (i32, i32, i32) {
    %c0_i32 = arith.constant 0 : i32
    %c0_i32_0 = arith.constant 0 : i32
    %c0_i32_1 = arith.constant 0 : i32
    %c0_i32_2 = arith.constant 0 : i32
    return %c0_i32, %c0_i32_0, %c0_i32_1 : i32, i32, i32
  }
  func.func @transform_4(%arg0: i32, %arg1: i32) -> (i32, i32) {
    %c0_i32 = arith.constant 0 : i32
    %c0_i32_0 = arith.constant 0 : i32
    %c0_i32_1 = arith.constant 0 : i32
    return %c0_i32, %c0_i32_0 : i32, i32
  }
  func.func @transform_5(%arg0: i32, %arg1: i32) -> (i32, i32) {
    %c0_i32 = arith.constant 0 : i32
    %c0_i32_0 = arith.constant 0 : i32
    %c0_i32_1 = arith.constant 0 : i32
    return %c0_i32, %c0_i32_0 : i32, i32
  }
  func.func @transform_6(%arg0: i32, %arg1: i32) -> (i32, i32, i32, i32) {
    %c0_i32 = arith.constant 0 : i32
    %c0_i32_0 = arith.constant 0 : i32
    %c0_i32_1 = arith.constant 0 : i32
    return %arg0, %arg1, %c0_i32, %c0_i32_0 : i32, i32, i32, i32
  }
  func.func @transform_7(%arg0: i32, %arg1: i32) -> (i32, i32, i32, i32) {
    %c0_i32 = arith.constant 0 : i32
    %c0_i32_0 = arith.constant 0 : i32
    %c0_i32_1 = arith.constant 0 : i32
    return %arg0, %arg1, %c0_i32, %c0_i32_0 : i32, i32, i32, i32
  }
}

</mosaic_0001>

<llo_original>
// kernel: tpu_custom_call.1
$region0: #{tpu_custom_call.1}
  #allocation0 [shape = 'u32[]', space=smem, size = 0x4, offset = 0x4, fixed_abs, tag = 'smem constant byte address 0x4 - core index']
  #allocation1 [shape = 'u32[72,128]{1,0:T(1,128)}', space=vmem, size = 0x9000, scoped, tag = 'internal scratch']
  #allocation2 [shape = 'f32[10,18,4]{2,1,0:T(8,128)}', space=vmem, size = 0x1e000, scoped, tag = 'scratch operand']
  %s0 = inlined_call_operand.vmem [shape: f32[2,16,16,4], index: 0, kind: input, shape index: {}]
  %s1 = inlined_call_operand.vmem [shape: f32[2,16,16,4], index: 1, kind: input, shape index: {}]
  %s2 = inlined_call_operand.vmem [shape: f32[2,16,16,4], index: 2, kind: input, shape index: {}]
  %s3 = inlined_call_operand.vmem [shape: f32[9,4,128], index: 3, kind: input, shape index: {}]
  %s4 = inlined_call_operand.vmem [shape: f32[1,4], index: 4, kind: input, shape index: {}]
  %s5 = inlined_call_operand.vmem [shape: f32[1,4], index: 5, kind: input, shape index: {}]
  %s6 = inlined_call_operand.hbm [shape: f32[2,16,16,128], index: 6, kind: output, shape index: {0}]
  %s7 = inlined_call_operand.hbm [shape: f32[2,2,2,128], index: 7, kind: output, shape index: {1}]
  %8 = xla_tuple %s6, %s7
  %s9 = sld [smem:[#allocation0]]
  $region65: #{tpu_custom_call.1} parent=0
    _
  %s11 = ssub.s32 1, %s9
  %s12 = scalar_select 0, %s11, %s9
  $region1: #{tpu_custom_call.1} parent=0
    #allocation3 [shape = 'u8[131072]{0}', space=vmem, size = 0x20000, scoped, tag = 'output window, operand 0']
    #allocation4 [shape = 's32[2]{0}', space=sflag, size = 0x8, scoped, tag = 'scoped memory for tpu_custom_call.1']
    #allocation5 [shape = 'u8[2048]{0}', space=vmem, size = 0x800, scoped, tag = 'output window, operand 1']
    #allocation6 [shape = 's32[2]{0}', space=sflag, size = 0x8, scoped, tag = 'scoped memory for tpu_custom_call.1']
    %13 = vsyncpa [#allocation4], 0
    %s14 = scalar_lea.sflag [#allocation4], 1
    %15 = vsyncpa %s14, 0
    %16 = vsyncpa [#allocation6], 0
    %s17 = scalar_lea.sflag [#allocation6], 1
    %18 = vsyncpa %s17, 0
    loop: start=0, step=1, limit=6
    $region2: #{tpu_custom_call.1} parent=1 // loop_pre_header
      _
    $region3: #{tpu_custom_call.1} parent=1 // loop_header
      %s20 = sphi 0, %s24
      %p21 = scmp.ge.s32.totalorder %s20, 6
      %s27 = sphi 0, %s39
      %s28 = sphi 0, %s35
      %s29 = sphi 0, %s27
      %s30 = sphi 0, %s28
      %s31 = sphi 0, %s29
      %s32 = sphi 0, %s30
      %s44 = sphi 0, %s46
      %s47 = sphi 0, %s44
      %s48 = sphi 0, %s47
      %s64 = sphi 0, %s48
      %s80 = sphi 0, %s82
      %s83 = sphi 0, %s80
      %s84 = sphi 0, %s83
      %s100 = sphi 0, %s84
      %s116 = sphi 0, %s118
      %s119 = sphi 0, %s116
      %s120 = sphi 0, %s119
      %s136 = sphi 0, %s120
      %s140 = sphi 0, %s140
      %s142 = sphi 0, %s140
      %s143 = sphi 0, %s142
      %s157 = sphi 0, %s143
      %s161 = sphi 0, %s161
      %s163 = sphi 0, %s161
      %s164 = sphi 0, %s163
      %s178 = sphi 0, %s164
      %s182 = sphi 0, %s182
      %s184 = sphi 0, %s182
      %s185 = sphi 0, %s184
      %s199 = sphi 0, %s185
      %s207 = sphi 0, %s209
      %s210 = sphi 0, %s207
      %s211 = sphi 0, %s210
      %s227 = sphi 0, %s211
      %s235 = sphi 0, %s237
      %s238 = sphi 0, %s235
      %s239 = sphi 0, %s238
      %s255 = sphi 0, %s239
    $region4: #{tpu_custom_call.1} parent=1 // loop_header_branch
      %23 = sbr.rel (%p21) target = $region8
    $region5: #{tpu_custom_call.1} parent=1 // loop_body
      %s25 = ssub.s32 %s20, 1
      %s26 = ssub.s32 %s20, 2
      %s33 = sadd.s32 1, %s28
      %p34 = scmp.ge.s32.totalorder %s33, 2
      %s35 = scalar_select %p34, 0, %s33
      %s36 = sadd.s32 1, %s27
      %s37 = scalar_select %p34, %s36, %s27
      %p38 = scmp.ge.s32.totalorder %s37, 2
      %s39 = scalar_select %p38, 0, %s37
      %s40 = ssub.s32 %s27, %s39
      %s41 = ssub.s32 %s28, %s35
      %s42 = sor.u32 %s40, %s41
      %p43 = scmp.eq.s32.totalorder %s42, 0
      %s45 = sadd.s32 %s44, 1
      %s46 = scalar_select %p43, %s44, %s45
      %p49 = pneg %p43
      %p50 = scmp.eq.s32.totalorder %s20, 3
      %p51 = por %p49, %p50
      %p52 = scmp.ne.s32.totalorder %s44, %s47
      %p53 = scmp.eq.s32.totalorder %s20, 0
      %p54 = por %p52, %p53
      %p55 = scmp.ne.s32.totalorder %s44, %s47
      %p56 = scmp.eq.s32.totalorder %s25, 3
      %p57 = por %p55, %p56
      %p58 = scmp.ne.s32.totalorder %s47, %s48
      %p59 = scmp.eq.s32.totalorder %s25, 0
      %p60 = por %p58, %p59
      %p61 = scmp.ne.s32.totalorder %s47, %s48
      %p62 = scmp.eq.s32.totalorder %s26, 3
      %p63 = por %p61, %p62
      %p65 = scmp.ne.s32.totalorder %s48, %s64
      %p66 = scmp.eq.s32.totalorder %s26, 0
      %p67 = por %p65, %p66
      %s68 = smul.u32 %s28, 8
      %s69 = ssub.s32 %s68, 1
      %p70 = scmp.gt.s32.totalorder %s69, 0
      %s71 = scalar_select %p70, %s69, 0
      %s72 = smul.u32 %s35, 8
      %s73 = ssub.s32 %s72, 1
      %p74 = scmp.gt.s32.totalorder %s73, 0
      %s75 = scalar_select %p74, %s73, 0
      %s76 = ssub.s32 %s27, %s39
      %s77 = ssub.s32 %s71, %s75
      %s78 = sor.u32 %s76, %s77
      %p79 = scmp.eq.s32.totalorder %s78, 0
      %s81 = sadd.s32 %s80, 1
      %s82 = scalar_select %p79, %s80, %s81
      %p85 = pneg %p79
      %p86 = scmp.eq.s32.totalorder %s20, 3
      %p87 = por %p85, %p86
      %p88 = scmp.ne.s32.totalorder %s80, %s83
      %p89 = scmp.eq.s32.totalorder %s20, 0
      %p90 = por %p88, %p89
      %p91 = scmp.ne.s32.totalorder %s80, %s83
      %p92 = scmp.eq.s32.totalorder %s25, 3
      %p93 = por %p91, %p92
      %p94 = scmp.ne.s32.totalorder %s83, %s84
      %p95 = scmp.eq.s32.totalorder %s25, 0
      %p96 = por %p94, %p95
      %p97 = scmp.ne.s32.totalorder %s83, %s84
      %p98 = scmp.eq.s32.totalorder %s26, 3
      %p99 = por %p97, %p98
      %p101 = scmp.ne.s32.totalorder %s84, %s100
      %p102 = scmp.eq.s32.totalorder %s26, 0
      %p103 = por %p101, %p102
      %s104 = smul.u32 %s28, 8
      %s105 = sadd.s32 %s104, 8
      %p106 = scmp.lt.s32.totalorder %s105, 15
      %s107 = scalar_select %p106, %s105, 15
      %s108 = smul.u32 %s35, 8
      %s109 = sadd.s32 %s108, 8
      %p110 = scmp.lt.s32.totalorder %s109, 15
      %s111 = scalar_select %p110, %s109, 15
      %s112 = ssub.s32 %s27, %s39
      %s113 = ssub.s32 %s107, %s111
      %s114 = sor.u32 %s112, %s113
      %p115 = scmp.eq.s32.totalorder %s114, 0
      %s117 = sadd.s32 %s116, 1
      %s118 = scalar_select %p115, %s116, %s117
      %p121 = pneg %p115
      %p122 = scmp.eq.s32.totalorder %s20, 3
      %p123 = por %p121, %p122
      %p124 = scmp.ne.s32.totalorder %s116, %s119
      %p125 = scmp.eq.s32.totalorder %s20, 0
      %p126 = por %p124, %p125
      %p127 = scmp.ne.s32.totalorder %s116, %s119
      %p128 = scmp.eq.s32.totalorder %s25, 3
      %p129 = por %p127, %p128
      %p130 = scmp.ne.s32.totalorder %s119, %s120
      %p131 = scmp.eq.s32.totalorder %s25, 0
      %p132 = por %p130, %p131
      %p133 = scmp.ne.s32.totalorder %s119, %s120
      %p134 = scmp.eq.s32.totalorder %s26, 3
      %p135 = por %p133, %p134
      %p137 = scmp.ne.s32.totalorder %s120, %s136
      %p138 = scmp.eq.s32.totalorder %s26, 0
      %p139 = por %p137, %p138
      %s141 = sadd.s32 %s140, 1
      %p144 = scmp.eq.s32.totalorder %s20, 3
      %p145 = scmp.ne.s32.totalorder %s140, %s142
      %p146 = scmp.eq.s32.totalorder %s20, 0
      %p147 = por %p145, %p146
      %p148 = scmp.ne.s32.totalorder %s140, %s142
      %p149 = scmp.eq.s32.totalorder %s25, 3
      %p150 = por %p148, %p149
      %p151 = scmp.ne.s32.totalorder %s142, %s143
      %p152 = scmp.eq.s32.totalorder %s25, 0
      %p153 = por %p151, %p152
      %p154 = scmp.ne.s32.totalorder %s142, %s143
      %p155 = scmp.eq.s32.totalorder %s26, 3
      %p156 = por %p154, %p155
      %p158 = scmp.ne.s32.totalorder %s143, %s157
      %p159 = scmp.eq.s32.totalorder %s26, 0
      %p160 = por %p158, %p159
      %s162 = sadd.s32 %s161, 1
      %p165 = scmp.eq.s32.totalorder %s20, 3
      %p166 = scmp.ne.s32.totalorder %s161, %s163
      %p167 = scmp.eq.s32.totalorder %s20, 0
      %p168 = por %p166, %p167
      %p169 = scmp.ne.s32.totalorder %s161, %s163
      %p170 = scmp.eq.s32.totalorder %s25, 3
      %p171 = por %p169, %p170
      %p172 = scmp.ne.s32.totalorder %s163, %s164
      %p173 = scmp.eq.s32.totalorder %s25, 0
      %p174 = por %p172, %p173
      %p175 = scmp.ne.s32.totalorder %s163, %s164
      %p176 = scmp.eq.s32.totalorder %s26, 3
      %p177 = por %p175, %p176
      %p179 = scmp.ne.s32.totalorder %s164, %s178
      %p180 = scmp.eq.s32.totalorder %s26, 0
      %p181 = por %p179, %p180
      %s183 = sadd.s32 %s182, 1
      %p186 = scmp.eq.s32.totalorder %s20, 3
      %p187 = scmp.ne.s32.totalorder %s182, %s184
      %p188 = scmp.eq.s32.totalorder %s20, 0
      %p189 = por %p187, %p188
      %p190 = scmp.ne.s32.totalorder %s182, %s184
      %p191 = scmp.eq.s32.totalorder %s25, 3
      %p192 = por %p190, %p191
      %p193 = scmp.ne.s32.totalorder %s184, %s185
      %p194 = scmp.eq.s32.totalorder %s25, 0
      %p195 = por %p193, %p194
      %p196 = scmp.ne.s32.totalorder %s184, %s185
      %p197 = scmp.eq.s32.totalorder %s26, 3
      %p198 = por %p196, %p197
      %p200 = scmp.ne.s32.totalorder %s185, %s199
      %p201 = scmp.eq.s32.totalorder %s26, 0
      %p202 = por %p200, %p201
      %s203 = ssub.s32 %s27, %s39
      %s204 = ssub.s32 %s28, %s35
      %s205 = sor.u32 %s203, %s204
      %p206 = scmp.eq.s32.totalorder %s205, 0
      %s208 = sadd.s32 %s207, 1
      %s209 = scalar_select %p206, %s207, %s208
      %p212 = pneg %p206
      %p213 = scmp.eq.s32.totalorder %s20, 3
      %p214 = por %p212, %p213
      %p215 = scmp.ne.s32.totalorder %s207, %s210
      %p216 = scmp.eq.s32.totalorder %s20, 0
      %p217 = por %p215, %p216
      %p218 = scmp.ne.s32.totalorder %s207, %s210
      %p219 = scmp.eq.s32.totalorder %s25, 3
      %p220 = por %p218, %p219
      %p221 = scmp.ne.s32.totalorder %s210, %s211
      %p222 = scmp.eq.s32.totalorder %s25, 0
      %p223 = por %p221, %p222
      %p224 = scmp.ne.s32.totalorder %s210, %s211
      %p225 = scmp.eq.s32.totalorder %s26, 3
      %p226 = por %p224, %p225
      %p228 = scmp.ne.s32.totalorder %s211, %s227
      %p229 = scmp.eq.s32.totalorder %s26, 0
      %p230 = por %p228, %p229
      %s231 = ssub.s32 %s27, %s39
      %s232 = ssub.s32 %s28, %s35
      %s233 = sor.u32 %s231, %s232
      %p234 = scmp.eq.s32.totalorder %s233, 0
      %s236 = sadd.s32 %s235, 1
      %s237 = scalar_select %p234, %s235, %s236
      %p240 = pneg %p234
      %p241 = scmp.eq.s32.totalorder %s20, 3
      %p242 = por %p240, %p241
      %p243 = scmp.ne.s32.totalorder %s235, %s238
      %p244 = scmp.eq.s32.totalorder %s20, 0
      %p245 = por %p243, %p244
      %p246 = scmp.ne.s32.totalorder %s235, %s238
      %p247 = scmp.eq.s32.totalorder %s25, 3
      %p248 = por %p246, %p247
      %p249 = scmp.ne.s32.totalorder %s238, %s239
      %p250 = scmp.eq.s32.totalorder %s25, 0
      %p251 = por %p249, %p250
      %p252 = scmp.ne.s32.totalorder %s238, %s239
      %p253 = scmp.eq.s32.totalorder %s26, 3
      %p254 = por %p252, %p253
      %p256 = scmp.ne.s32.totalorder %s239, %s255
      %p257 = scmp.eq.s32.totalorder %s26, 0
      %p258 = por %p256, %p257
      %p259 = scmp.le.s32.totalorder 1, %s20
      %p260 = scmp.lt.s32.totalorder %s20, 5
      %p261 = pnand %p259, %p260
      %p262 = pneg %p261
      // Predicated region
      $region9: #{tpu_custom_call.1} parent=5 // pred_check
        _
      $region10: #{tpu_custom_call.1} parent=5 // pred_check_branch
        %264 = sbr.rel (%p261) target = $region12
      $region11: #{tpu_custom_call.1} parent=5 // pred_region
        %s265 = ssub.s32 %s20, 1
        // Predicated region
        $region13: #{tpu_custom_call.1} parent=11 // pred_check
          %p266 = pneg %p153
        $region14: #{tpu_custom_call.1} parent=11 // pred_check_branch
          %268 = sbr.rel (%p266) target = $region16
        $region15: #{tpu_custom_call.1} parent=11 // pred_region
          _
        $region16: #{tpu_custom_call.1} parent=11 // pred_fallthru
          _
        // Predicated region
        $region17: #{tpu_custom_call.1} parent=11 // pred_check
          %p269 = pneg %p174
        $region18: #{tpu_custom_call.1} parent=11 // pred_check_branch
          %271 = sbr.rel (%p269) target = $region20
        $region19: #{tpu_custom_call.1} parent=11 // pred_region
          _
        $region20: #{tpu_custom_call.1} parent=11 // pred_fallthru
          _
        // Predicated region
        $region21: #{tpu_custom_call.1} parent=11 // pred_check
          %p272 = pneg %p195
        $region22: #{tpu_custom_call.1} parent=11 // pred_check_branch
          %274 = sbr.rel (%p272) target = $region24
        $region23: #{tpu_custom_call.1} parent=11 // pred_region
          _
        $region24: #{tpu_custom_call.1} parent=11 // pred_fallthru
          _
      $region12: #{tpu_custom_call.1} parent=5 // pred_fallthru
        _
      %p275 = scmp.lt.s32.totalorder %s20, 4
      // Predicated region
      $region25: #{tpu_custom_call.1} parent=5 // pred_check
        %p276 = pneg %p275
      $region26: #{tpu_custom_call.1} parent=5 // pred_check_branch
        %278 = sbr.rel (%p276) target = $region28
      $region27: #{tpu_custom_call.1} parent=5 // pred_region
        // Predicated region
        $region29: #{tpu_custom_call.1} parent=27 // pred_check
          %p279 = pneg %p54
        $region30: #{tpu_custom_call.1} parent=27 // pred_check_branch
          %281 = sbr.rel (%p279) target = $region32
        $region31: #{tpu_custom_call.1} parent=27 // pred_region
          %s282 = smul.u32 8, %s28
          %p283 = scmp.lt.s32.totalorder %s27, 1
          %s284 = scalar_select %p283, %s27, 1
          %p285 = scmp.lt.s32.totalorder %s282, 15
          %s286 = scalar_select %p285, %s282, 15
          %s287 = smul.addr %s286, 2
          %s288 = smul.addr %s284, 32
          %s289 = sadd.s32 %s287, %s288
          %s290 = smul.addr %s289, 8
          %s291 = scalar_lea.vmem %s0, %s290
          %s292 = smul.u32 8, %s28
        $region32: #{tpu_custom_call.1} parent=27 // pred_fallthru
          _
        // Predicated region
        $region33: #{tpu_custom_call.1} parent=27 // pred_check
          %p293 = pneg %p90
        $region34: #{tpu_custom_call.1} parent=27 // pred_check_branch
          %295 = sbr.rel (%p293) target = $region36
        $region35: #{tpu_custom_call.1} parent=27 // pred_region
          %s296 = smul.u32 %s28, 8
          %s297 = ssub.s32 %s296, 1
          %p298 = scmp.gt.s32.totalorder %s297, 0
          %s299 = scalar_select %p298, %s297, 0
          %p300 = scmp.lt.s32.totalorder %s27, 1
          %s301 = scalar_select %p300, %s27, 1
          %p302 = scmp.lt.s32.totalorder %s299, 15
          %s303 = scalar_select %p302, %s299, 15
          %s304 = smul.addr %s303, 2
          %s305 = smul.addr %s301, 32
          %s306 = sadd.s32 %s304, %s305
          %s307 = smul.addr %s306, 8
          %s308 = scalar_lea.vmem %s1, %s307
          %s309 = smul.u32 %s28, 8
          %s310 = ssub.s32 %s309, 1
          %p311 = scmp.gt.s32.totalorder %s310, 0
          %s312 = scalar_select %p311, %s310, 0
        $region36: #{tpu_custom_call.1} parent=27 // pred_fallthru
          _
        // Predicated region
        $region37: #{tpu_custom_call.1} parent=27 // pred_check
          %p313 = pneg %p126
        $region38: #{tpu_custom_call.1} parent=27 // pred_check_branch
          %315 = sbr.rel (%p313) target = $region40
        $region39: #{tpu_custom_call.1} parent=27 // pred_region
          %s316 = smul.u32 %s28, 8
          %s317 = sadd.s32 %s316, 8
          %p318 = scmp.lt.s32.totalorder %s317, 15
          %s319 = scalar_select %p318, %s317, 15
          %p320 = scmp.lt.s32.totalorder %s27, 1
          %s321 = scalar_select %p320, %s27, 1
          %p322 = scmp.lt.s32.totalorder %s319, 15
          %s323 = scalar_select %p322, %s319, 15
          %s324 = smul.addr %s323, 2
          %s325 = smul.addr %s321, 32
          %s326 = sadd.s32 %s324, %s325
          %s327 = smul.addr %s326, 8
          %s328 = scalar_lea.vmem %s2, %s327
          %s329 = smul.u32 %s28, 8
          %s330 = sadd.s32 %s329, 8
          %p331 = scmp.lt.s32.totalorder %s330, 15
          %s332 = scalar_select %p331, %s330, 15
        $region40: #{tpu_custom_call.1} parent=27 // pred_fallthru
          _
      $region28: #{tpu_custom_call.1} parent=5 // pred_fallthru
        _
      %p333 = scmp.le.s32.totalorder 1, %s20
      %p334 = scmp.lt.s32.totalorder %s20, 5
      %p335 = pnand %p333, %p334
      %p336 = pneg %p335
      // Predicated region
      $region41: #{tpu_custom_call.1} parent=5 // pred_check
        _
      $region42: #{tpu_custom_call.1} parent=5 // pred_check_branch
        %338 = sbr.rel (%p335) target = $region44
      $region43: #{tpu_custom_call.1} parent=5 // pred_region
        %s339 = ssub.s32 %s20, 1
        %s340 = smul.u32 8, %s30
        %p341 = scmp.lt.s32.totalorder %s29, 1
        %s342 = scalar_select %p341, %s29, 1
        %p343 = scmp.lt.s32.totalorder %s340, 15
        %s344 = scalar_select %p343, %s340, 15
        %s345 = smul.addr %s344, 2
        %s346 = smul.addr %s342, 32
        %s347 = sadd.s32 %s345, %s346
        %s348 = smul.addr %s347, 8
        %s349 = scalar_lea.vmem %s0, %s348
        %p350 = pneg %p60
        %p351 = pneg %p57
        %s352 = smul.u32 %s30, 8
        %s353 = ssub.s32 %s352, 1
        %p354 = scmp.gt.s32.totalorder %s353, 0
        %s355 = scalar_select %p354, %s353, 0
        %p356 = scmp.lt.s32.totalorder %s29, 1
        %s357 = scalar_select %p356, %s29, 1
        %p358 = scmp.lt.s32.totalorder %s355, 15
        %s359 = scalar_select %p358, %s355, 15
        %s360 = smul.addr %s359, 2
        %s361 = smul.addr %s357, 32
        %s362 = sadd.s32 %s360, %s361
        %s363 = smul.addr %s362, 8
        %s364 = scalar_lea.vmem %s1, %s363
        %p365 = pneg %p96
        %p366 = pneg %p93
        %s367 = smul.u32 %s30, 8
        %s368 = sadd.s32 %s367, 8
        %p369 = scmp.lt.s32.totalorder %s368, 15
        %s370 = scalar_select %p369, %s368, 15
        %p371 = scmp.lt.s32.totalorder %s29, 1
        %s372 = scalar_select %p371, %s29, 1
        %p373 = scmp.lt.s32.totalorder %s370, 15
        %s374 = scalar_select %p373, %s370, 15
        %s375 = smul.addr %s374, 2
        %s376 = smul.addr %s372, 32
        %s377 = sadd.s32 %s375, %s376
        %s378 = smul.addr %s377, 8
        %s379 = scalar_lea.vmem %s2, %s378
        %p380 = pneg %p132
        %p381 = pneg %p129
        %p382 = pneg %p153
        %p383 = pneg %p150
        %p384 = pneg %p174
        %p385 = pneg %p171
        %p386 = pneg %p195
        %p387 = pneg %p192
        %p388 = pneg %p223
        %p389 = pneg %p220
        %s390 = sand.u32 %s210, 1
        %s391 = scalar_lea.sflag [#allocation4], %s390
        %s392 = sand.u32 %s210, 1
        %s393 = smul.addr %s392, 128
        %s394 = scalar_lea.vmem [#allocation3], %s393
        %p395 = pneg %p251
        %p396 = pneg %p248
        %s397 = sand.u32 %s238, 1
        %s398 = scalar_lea.sflag [#allocation6], %s397
        %s399 = sand.u32 %s238, 1
        %s400 = smul.addr %s399, 2
        %s401 = scalar_lea.vmem [#allocation5], %s400
        %s402 = smul.u32 8, %s30
        %p403 = scmp.lt.s32.totalorder %s29, 1
        %s404 = scalar_select %p403, %s29, 1
        %p405 = scmp.lt.s32.totalorder %s402, 15
        %s406 = scalar_select %p405, %s402, 15
        %s407 = smul.addr %s406, 2
        %s408 = smul.addr %s404, 32
        %s409 = sadd.s32 %s407, %s408
        %s410 = smul.addr %s409, 8
        %s411 = scalar_lea.vmem %s0, %s410
        %s412 = smul.u32 8, %s30
        %s413 = smul.u32 %s30, 8
        %s414 = ssub.s32 %s413, 1
        %p415 = scmp.gt.s32.totalorder %s414, 0
        %s416 = scalar_select %p415, %s414, 0
        %p417 = scmp.lt.s32.totalorder %s29, 1
        %s418 = scalar_select %p417, %s29, 1
        %p419 = scmp.lt.s32.totalorder %s416, 15
        %s420 = scalar_select %p419, %s416, 15
        %s421 = smul.addr %s420, 2
        %s422 = smul.addr %s418, 32
        %s423 = sadd.s32 %s421, %s422
        %s424 = smul.addr %s423, 8
        %s425 = scalar_lea.vmem %s1, %s424
        %s426 = smul.u32 %s30, 8
        %s427 = ssub.s32 %s426, 1
        %p428 = scmp.gt.s32.totalorder %s427, 0
        %s429 = scalar_select %p428, %s427, 0
        %s430 = smul.u32 %s30, 8
        %s431 = sadd.s32 %s430, 8
        %p432 = scmp.lt.s32.totalorder %s431, 15
        %s433 = scalar_select %p432, %s431, 15
        %p434 = scmp.lt.s32.totalorder %s29, 1
        %s435 = scalar_select %p434, %s29, 1
        %p436 = scmp.lt.s32.totalorder %s433, 15
        %s437 = scalar_select %p436, %s433, 15
        %s438 = smul.addr %s437, 2
        %s439 = smul.addr %s435, 32
        %s440 = sadd.s32 %s438, %s439
        %s441 = smul.addr %s440, 8
        %s442 = scalar_lea.vmem %s2, %s441
        %s443 = smul.u32 %s30, 8
        %s444 = sadd.s32 %s443, 8
        %p445 = scmp.lt.s32.totalorder %s444, 15
        %s446 = scalar_select %p445, %s444, 15
        %s447 = smul.u32 8, %s30
        %vm448 = vcmask 24576
        %449 = vst.msk [vmem:[#allocation2] sm:$0x1] %vm448, 0.0
        %450 = vst.msk [vmem:[#allocation2 + $0x18] sm:$0x1] %vm448, 0.0
        %451 = vst.msk [vmem:[#allocation2 + $0x30] sm:$0x1] %vm448, 0.0
        %452 = vst.msk [vmem:[#allocation2 + $0x48] sm:$0x1] %vm448, 0.0
        %453 = vst.msk [vmem:[#allocation2 + $0x60] sm:$0x1] %vm448, 0.0
        %454 = vst.msk [vmem:[#allocation2 + $0x78] sm:$0x1] %vm448, 0.0
        %455 = vst.msk [vmem:[#allocation2 + $0x90] sm:$0x1] %vm448, 0.0
        %456 = vst.msk [vmem:[#allocation2 + $0xa8] sm:$0x1] %vm448, 0.0
        %457 = vst.msk [vmem:[#allocation2 + $0xc0] sm:$0x1] %vm448, 0.0
        %458 = vst.msk [vmem:[#allocation2 + $0xd8] sm:$0x1] %vm448, 0.0
        %459 = vst.msk [vmem:[#allocation2 + $0x11] sm:$0x1] %vm448, 0.0
        %460 = vst.msk [vmem:[#allocation2 + $0x29] sm:$0x1] %vm448, 0.0
        %461 = vst.msk [vmem:[#allocation2 + $0x41] sm:$0x1] %vm448, 0.0
        %462 = vst.msk [vmem:[#allocation2 + $0x59] sm:$0x1] %vm448, 0.0
        %463 = vst.msk [vmem:[#allocation2 + $0x71] sm:$0x1] %vm448, 0.0
        %464 = vst.msk [vmem:[#allocation2 + $0x89] sm:$0x1] %vm448, 0.0
        %465 = vst.msk [vmem:[#allocation2 + $0xa1] sm:$0x1] %vm448, 0.0
        %466 = vst.msk [vmem:[#allocation2 + $0xb9] sm:$0x1] %vm448, 0.0
        %467 = vst.msk [vmem:[#allocation2 + $0xd1] sm:$0x1] %vm448, 0.0
        %468 = vst.msk [vmem:[#allocation2 + $0xe9] sm:$0x1] %vm448, 0.0
        %v469 = vld [vmem:[%s411] sm:$0xff]
        %v470 = vld [vmem:[%s411 + $0x8] sm:$0xff]
        %v471 = vld [vmem:[%s411 + $0x10] sm:$0xff]
        %v472 = vld [vmem:[%s411 + $0x18] sm:$0xff]
        %v473 = vld [vmem:[%s411 + $0x20] sm:$0xff]
        %v474 = vld [vmem:[%s411 + $0x28] sm:$0xff]
        %v475 = vld [vmem:[%s411 + $0x30] sm:$0xff]
        %v476 = vld [vmem:[%s411 + $0x38] sm:$0xff]
        %v477 = vld [vmem:[%s411 + $0x40] sm:$0xff]
        %v478 = vld [vmem:[%s411 + $0x48] sm:$0xff]
        %v479 = vld [vmem:[%s411 + $0x50] sm:$0xff]
        %v480 = vld [vmem:[%s411 + $0x58] sm:$0xff]
        %v481 = vld [vmem:[%s411 + $0x60] sm:$0xff]
        %v482 = vld [vmem:[%s411 + $0x68] sm:$0xff]
        %v483 = vld [vmem:[%s411 + $0x70] sm:$0xff]
        %v484 = vld [vmem:[%s411 + $0x78] sm:$0xff]
        %s485 = scalar_lea.vmem [#allocation2], 24
        %vm486 = vcmask 31744
        %487 = vst.msk [vmem:[%s485 + $0x1] sm:$0xff] %vm486, %v469
        %488 = vst.msk [vmem:[%s485 + $0x9] sm:$0xff] %vm486, %v470
        %489 = vst.msk [vmem:[%s485 + $0x19] sm:$0xff] %vm486, %v471
        %490 = vst.msk [vmem:[%s485 + $0x21] sm:$0xff] %vm486, %v472
        %491 = vst.msk [vmem:[%s485 + $0x31] sm:$0xff] %vm486, %v473
        %492 = vst.msk [vmem:[%s485 + $0x39] sm:$0xff] %vm486, %v474
        %493 = vst.msk [vmem:[%s485 + $0x49] sm:$0xff] %vm486, %v475
        %494 = vst.msk [vmem:[%s485 + $0x51] sm:$0xff] %vm486, %v476
        %495 = vst.msk [vmem:[%s485 + $0x61] sm:$0xff] %vm486, %v477
        %496 = vst.msk [vmem:[%s485 + $0x69] sm:$0xff] %vm486, %v478
        %497 = vst.msk [vmem:[%s485 + $0x79] sm:$0xff] %vm486, %v479
        %498 = vst.msk [vmem:[%s485 + $0x81] sm:$0xff] %vm486, %v480
        %499 = vst.msk [vmem:[%s485 + $0x91] sm:$0xff] %vm486, %v481
        %500 = vst.msk [vmem:[%s485 + $0x99] sm:$0xff] %vm486, %v482
        %501 = vst.msk [vmem:[%s485 + $0xa9] sm:$0xff] %vm486, %v483
        %502 = vst.msk [vmem:[%s485 + $0xb1] sm:$0xff] %vm486, %v484
        %p503 = scmp.gt.s32.totalorder %s30, 0
        %s504 = scalar_select %p503, 1.0, 0.0
        %v505 = vld [vmem:[%s425] sm:$0xff]
        %v506 = vld [vmem:[%s425 + $0x8] sm:$0xff]
        %v507 = vstv %s504
        %v508 = vmul.f32 %v505, %v507
        %v509 = vmul.f32 %v506, %v507
        %510 = vst.msk [vmem:[#allocation2 + $0x1] sm:$0xff] %vm486, %v508
        %511 = vst.msk [vmem:[#allocation2 + $0x9] sm:$0xff] %vm486, %v509
        %p512 = scmp.lt.s32.totalorder %s30, 1
        %s513 = scalar_select %p512, 1.0, 0.0
        %v514 = vld [vmem:[%s442] sm:$0xff]
        %v515 = vld [vmem:[%s442 + $0x8] sm:$0xff]
        %v516 = vstv %s513
        %v517 = vmul.f32 %v514, %v516
        %v518 = vmul.f32 %v515, %v516
        %s519 = scalar_lea.vmem [#allocation2], 216
        %520 = vst.msk [vmem:[%s519 + $0x1] sm:$0xff] %vm486, %v517
        %521 = vst.msk [vmem:[%s519 + $0x9] sm:$0xff] %vm486, %v518
        %v522 = vld [vmem:[#allocation2] sm:$0xff]
        %v523 = vld [vmem:[#allocation2 + $0x8] sm:$0xff]
        %v524 = vld [vmem:[#allocation2 + $0x18] sm:$0xff]
        %v525 = vld [vmem:[#allocation2 + $0x20] sm:$0xff]
        %v526 = vld [vmem:[#allocation2 + $0x30] sm:$0xff]
        %v527 = vld [vmem:[#allocation2 + $0x38] sm:$0xff]
        %v528 = vld [vmem:[#allocation2 + $0x48] sm:$0xff]
        %v529 = vld [vmem:[#allocation2 + $0x50] sm:$0xff]
        %v530 = vld [vmem:[#allocation2 + $0x60] sm:$0xff]
        %v531 = vld [vmem:[#allocation2 + $0x68] sm:$0xff]
        %v532 = vld [vmem:[#allocation2 + $0x78] sm:$0xff]
        %v533 = vld [vmem:[#allocation2 + $0x80] sm:$0xff]
        %v534 = vld [vmem:[#allocation2 + $0x90] sm:$0xff]
        %v535 = vld [vmem:[#allocation2 + $0x98] sm:$0xff]
        %v536 = vld [vmem:[#allocation2 + $0xa8] sm:$0xff]
        %v537 = vld [vmem:[#allocation2 + $0xb0] sm:$0xff]
        %v538 = vld [vmem:[%s3] sm:$0xf]
        %v539 = vld [vmem:[#allocation2 + $0x1] sm:$0xff]
        %v540 = vld [vmem:[#allocation2 + $0x9] sm:$0xff]
        %v541 = vld [vmem:[#allocation2 + $0x19] sm:$0xff]
        %v542 = vld [vmem:[#allocation2 + $0x21] sm:$0xff]
        %v543 = vld [vmem:[#allocation2 + $0x31] sm:$0xff]
        %v544 = vld [vmem:[#allocation2 + $0x39] sm:$0xff]
        %v545 = vld [vmem:[#allocation2 + $0x49] sm:$0xff]
        %v546 = vld [vmem:[#allocation2 + $0x51] sm:$0xff]
        %v547 = vld [vmem:[#allocation2 + $0x61] sm:$0xff]
        %v548 = vld [vmem:[#allocation2 + $0x69] sm:$0xff]
        %v549 = vld [vmem:[#allocation2 + $0x79] sm:$0xff]
        %v550 = vld [vmem:[#allocation2 + $0x81] sm:$0xff]
        %v551 = vld [vmem:[#allocation2 + $0x91] sm:$0xff]
        %v552 = vld [vmem:[#allocation2 + $0x99] sm:$0xff]
        %v553 = vld [vmem:[#allocation2 + $0xa9] sm:$0xff]
        %v554 = vld [vmem:[#allocation2 + $0xb1] sm:$0xff]
        %s555 = scalar_lea.vmem %s3, 4
        %v556 = vld [vmem:[%s555] sm:$0xf]
        %v558 = vsel %vm486, %v539, 0
        %v561 = vsel %vm486, %v540, 0
        %v564 = vsel %vm486, %v541, 0
        %v567 = vsel %vm486, %v542, 0
        %v570 = vsel %vm486, %v543, 0
        %v573 = vsel %vm486, %v544, 0
        %v576 = vsel %vm486, %v545, 0
        %v579 = vsel %vm486, %v546, 0
        %v582 = vsel %vm486, %v547, 0
        %v585 = vsel %vm486, %v548, 0
        %v588 = vsel %vm486, %v549, 0
        %v591 = vsel %vm486, %v550, 0
        %v594 = vsel %vm486, %v551, 0
        %v597 = vsel %vm486, %v552, 0
        %v600 = vsel %vm486, %v553, 0
        %v603 = vsel %vm486, %v554, 0
        %vm605 = vcmask 1043456
        %v607 = vsel %vm605, %v556, 0
        %609 = vmatpush.msra.mxu0 0.0
        %610 = vmatpush.msra.mxu0 0.0
        %611 = vmatpush.msra.mxu0 0.0
        %612 = vmatpush.msra.mxu0 0.0
        %613 = vmatpush.msra.mxu0 0.0
        %614 = vmatpush.msra.mxu0 0.0
        %615 = vmatpush.msra.mxu0 0.0
        %616 = vmatpush.msra.mxu0 0.0
        %617 = vmatpush.msra.mxu0 0.0
        %618 = vmatpush.msra.mxu0 0.0
        %619 = vmatpush.msra.mxu0 0.0
        %620 = vmatpush.msra.mxu0 0.0
        %621 = vmatpush.msra.mxu0 0.0
        %622 = vmatpush.msra.mxu0 0.0
        %623 = vmatpush.msra.mxu0 0.0
        %624 = vmatpush.msra.mxu0 %v607
        %625 = vmatmul.f32.gmra.mxu0 %v558
        %v626 = vpop.f32.mrf.mxu0
        %v627 = vadd.f32 0.0, %v626
        %628 = vmatmul.f32.gmra.mxu0 %v561
        %v629 = vpop.f32.mrf.mxu0
        %v630 = vadd.f32 0.0, %v629
        %631 = vmatmul.f32.gmra.mxu0 %v564
        %v632 = vpop.f32.mrf.mxu0
        %v633 = vadd.f32 0.0, %v632
        %634 = vmatmul.f32.gmra.mxu0 %v567
        %v635 = vpop.f32.mrf.mxu0
        %v636 = vadd.f32 0.0, %v635
        %637 = vmatmul.f32.gmra.mxu0 %v570
        %v638 = vpop.f32.mrf.mxu0
        %v639 = vadd.f32 0.0, %v638
        %640 = vmatmul.f32.gmra.mxu0 %v573
        %v641 = vpop.f32.mrf.mxu0
        %v642 = vadd.f32 0.0, %v641
        %643 = vmatmul.f32.gmra.mxu0 %v576
        %v644 = vpop.f32.mrf.mxu0
        %v645 = vadd.f32 0.0, %v644
        %646 = vmatmul.f32.gmra.mxu0 %v579
        %v647 = vpop.f32.mrf.mxu0
        %v648 = vadd.f32 0.0, %v647
        %649 = vmatmul.f32.gmra.mxu0 %v582
        %v650 = vpop.f32.mrf.mxu0
        %v651 = vadd.f32 0.0, %v650
        %652 = vmatmul.f32.gmra.mxu0 %v585
        %v653 = vpop.f32.mrf.mxu0
        %v654 = vadd.f32 0.0, %v653
        %655 = vmatmul.f32.gmra.mxu0 %v588
        %v656 = vpop.f32.mrf.mxu0
        %v657 = vadd.f32 0.0, %v656
        %658 = vmatmul.f32.gmra.mxu0 %v591
        %v659 = vpop.f32.mrf.mxu0
        %v660 = vadd.f32 0.0, %v659
        %661 = vmatmul.f32.gmra.mxu0 %v594
        %v662 = vpop.f32.mrf.mxu0
        %v663 = vadd.f32 0.0, %v662
        %664 = vmatmul.f32.gmra.mxu0 %v597
        %v665 = vpop.f32.mrf.mxu0
        %v666 = vadd.f32 0.0, %v665
        %667 = vmatmul.f32.gmra.mxu0 %v600
        %v668 = vpop.f32.mrf.mxu0
        %v669 = vadd.f32 0.0, %v668
        %670 = vmatmul.f32.gmra.mxu0 %v603
        %v671 = vpop.f32.mrf.mxu0
        %v672 = vadd.f32 0.0, %v671
        %673 = vdwg.mxu0
        %v675 = vsel %vm486, %v522, 0
        %v678 = vsel %vm486, %v523, 0
        %v681 = vsel %vm486, %v524, 0
        %v684 = vsel %vm486, %v525, 0
        %v687 = vsel %vm486, %v526, 0
        %v690 = vsel %vm486, %v527, 0
        %v693 = vsel %vm486, %v528, 0
        %v696 = vsel %vm486, %v529, 0
        %v699 = vsel %vm486, %v530, 0
        %v702 = vsel %vm486, %v531, 0
        %v705 = vsel %vm486, %v532, 0
        %v708 = vsel %vm486, %v533, 0
        %v711 = vsel %vm486, %v534, 0
        %v714 = vsel %vm486, %v535, 0
        %v717 = vsel %vm486, %v536, 0
        %v720 = vsel %vm486, %v537, 0
        %v723 = vsel %vm605, %v538, 0
        %725 = vmatpush.msra.mxu0 0.0
        %726 = vmatpush.msra.mxu0 0.0
        %727 = vmatpush.msra.mxu0 0.0
        %728 = vmatpush.msra.mxu0 0.0
        %729 = vmatpush.msra.mxu0 0.0
        %730 = vmatpush.msra.mxu0 0.0
        %731 = vmatpush.msra.mxu0 0.0
        %732 = vmatpush.msra.mxu0 0.0
        %733 = vmatpush.msra.mxu0 0.0
        %734 = vmatpush.msra.mxu0 0.0
        %735 = vmatpush.msra.mxu0 0.0
        %736 = vmatpush.msra.mxu0 0.0
        %737 = vmatpush.msra.mxu0 0.0
        %738 = vmatpush.msra.mxu0 0.0
        %739 = vmatpush.msra.mxu0 0.0
        %740 = vmatpush.msra.mxu0 %v723
        %741 = vmatmul.f32.gmra.mxu0 %v675
        %v742 = vpop.f32.mrf.mxu0
        %v743 = vadd.f32 %v627, %v742
        %744 = vmatmul.f32.gmra.mxu0 %v678
        %v745 = vpop.f32.mrf.mxu0
        %v746 = vadd.f32 %v630, %v745
        %747 = vmatmul.f32.gmra.mxu0 %v681
        %v748 = vpop.f32.mrf.mxu0
        %v749 = vadd.f32 %v633, %v748
        %750 = vmatmul.f32.gmra.mxu0 %v684
        %v751 = vpop.f32.mrf.mxu0
        %v752 = vadd.f32 %v636, %v751
        %753 = vmatmul.f32.gmra.mxu0 %v687
        %v754 = vpop.f32.mrf.mxu0
        %v755 = vadd.f32 %v639, %v754
        %756 = vmatmul.f32.gmra.mxu0 %v690
        %v757 = vpop.f32.mrf.mxu0
        %v758 = vadd.f32 %v642, %v757
        %759 = vmatmul.f32.gmra.mxu0 %v693
        %v760 = vpop.f32.mrf.mxu0
        %v761 = vadd.f32 %v645, %v760
        %762 = vmatmul.f32.gmra.mxu0 %v696
        %v763 = vpop.f32.mrf.mxu0
        %v764 = vadd.f32 %v648, %v763
        %765 = vmatmul.f32.gmra.mxu0 %v699
        %v766 = vpop.f32.mrf.mxu0
        %v767 = vadd.f32 %v651, %v766
        %768 = vmatmul.f32.gmra.mxu0 %v702
        %v769 = vpop.f32.mrf.mxu0
        %v770 = vadd.f32 %v654, %v769
        %771 = vmatmul.f32.gmra.mxu0 %v705
        %v772 = vpop.f32.mrf.mxu0
        %v773 = vadd.f32 %v657, %v772
        %774 = vmatmul.f32.gmra.mxu0 %v708
        %v775 = vpop.f32.mrf.mxu0
        %v776 = vadd.f32 %v660, %v775
        %777 = vmatmul.f32.gmra.mxu0 %v711
        %v778 = vpop.f32.mrf.mxu0
        %v779 = vadd.f32 %v663, %v778
        %780 = vmatmul.f32.gmra.mxu0 %v714
        %v781 = vpop.f32.mrf.mxu0
        %v782 = vadd.f32 %v666, %v781
        %783 = vmatmul.f32.gmra.mxu0 %v717
        %v784 = vpop.f32.mrf.mxu0
        %v785 = vadd.f32 %v669, %v784
        %786 = vmatmul.f32.gmra.mxu0 %v720
        %v787 = vpop.f32.mrf.mxu0
        %v788 = vadd.f32 %v672, %v787
        %789 = vdwg.mxu0
        %v790 = vld [vmem:[#allocation2 + $0x2] sm:$0xff]
        %v791 = vld [vmem:[#allocation2 + $0xa] sm:$0xff]
        %v792 = vld [vmem:[#allocation2 + $0x1a] sm:$0xff]
        %v793 = vld [vmem:[#allocation2 + $0x22] sm:$0xff]
        %v794 = vld [vmem:[#allocation2 + $0x32] sm:$0xff]
        %v795 = vld [vmem:[#allocation2 + $0x3a] sm:$0xff]
        %v796 = vld [vmem:[#allocation2 + $0x4a] sm:$0xff]
        %v797 = vld [vmem:[#allocation2 + $0x52] sm:$0xff]
        %v798 = vld [vmem:[#allocation2 + $0x62] sm:$0xff]
        %v799 = vld [vmem:[#allocation2 + $0x6a] sm:$0xff]
        %v800 = vld [vmem:[#allocation2 + $0x7a] sm:$0xff]
        %v801 = vld [vmem:[#allocation2 + $0x82] sm:$0xff]
        %v802 = vld [vmem:[#allocation2 + $0x92] sm:$0xff]
        %v803 = vld [vmem:[#allocation2 + $0x9a] sm:$0xff]
        %v804 = vld [vmem:[#allocation2 + $0xaa] sm:$0xff]
        %v805 = vld [vmem:[#allocation2 + $0xb2] sm:$0xff]
        %s806 = scalar_lea.vmem %s3, 8
        %v807 = vld [vmem:[%s806] sm:$0xf]
        %v809 = vsel %vm486, %v790, 0
        %v812 = vsel %vm486, %v791, 0
        %v815 = vsel %vm486, %v792, 0
        %v818 = vsel %vm486, %v793, 0
        %v821 = vsel %vm486, %v794, 0
        %v824 = vsel %vm486, %v795, 0
        %v827 = vsel %vm486, %v796, 0
        %v830 = vsel %vm486, %v797, 0
        %v833 = vsel %vm486, %v798, 0
        %v836 = vsel %vm486, %v799, 0
        %v839 = vsel %vm486, %v800, 0
        %v842 = vsel %vm486, %v801, 0
        %v845 = vsel %vm486, %v802, 0
        %v848 = vsel %vm486, %v803, 0
        %v851 = vsel %vm486, %v804, 0
        %v854 = vsel %vm486, %v805, 0
        %v857 = vsel %vm605, %v807, 0
        %859 = vmatpush.msra.mxu0 0.0
        %860 = vmatpush.msra.mxu0 0.0
        %861 = vmatpush.msra.mxu0 0.0
        %862 = vmatpush.msra.mxu0 0.0
        %863 = vmatpush.msra.mxu0 0.0
        %864 = vmatpush.msra.mxu0 0.0
        %865 = vmatpush.msra.mxu0 0.0
        %866 = vmatpush.msra.mxu0 0.0
        %867 = vmatpush.msra.mxu0 0.0
        %868 = vmatpush.msra.mxu0 0.0
        %869 = vmatpush.msra.mxu0 0.0
        %870 = vmatpush.msra.mxu0 0.0
        %871 = vmatpush.msra.mxu0 0.0
        %872 = vmatpush.msra.mxu0 0.0
        %873 = vmatpush.msra.mxu0 0.0
        %874 = vmatpush.msra.mxu0 %v857
        %875 = vmatmul.f32.gmra.mxu0 %v809
        %v876 = vpop.f32.mrf.mxu0
        %v877 = vadd.f32 0.0, %v876
        %878 = vmatmul.f32.gmra.mxu0 %v812
        %v879 = vpop.f32.mrf.mxu0
        %v880 = vadd.f32 0.0, %v879
        %881 = vmatmul.f32.gmra.mxu0 %v815
        %v882 = vpop.f32.mrf.mxu0
        %v883 = vadd.f32 0.0, %v882
        %884 = vmatmul.f32.gmra.mxu0 %v818
        %v885 = vpop.f32.mrf.mxu0
        %v886 = vadd.f32 0.0, %v885
        %887 = vmatmul.f32.gmra.mxu0 %v821
        %v888 = vpop.f32.mrf.mxu0
        %v889 = vadd.f32 0.0, %v888
        %890 = vmatmul.f32.gmra.mxu0 %v824
        %v891 = vpop.f32.mrf.mxu0
        %v892 = vadd.f32 0.0, %v891
        %893 = vmatmul.f32.gmra.mxu0 %v827
        %v894 = vpop.f32.mrf.mxu0
        %v895 = vadd.f32 0.0, %v894
        %896 = vmatmul.f32.gmra.mxu0 %v830
        %v897 = vpop.f32.mrf.mxu0
        %v898 = vadd.f32 0.0, %v897
        %899 = vmatmul.f32.gmra.mxu0 %v833
        %v900 = vpop.f32.mrf.mxu0
        %v901 = vadd.f32 0.0, %v900
        %902 = vmatmul.f32.gmra.mxu0 %v836
        %v903 = vpop.f32.mrf.mxu0
        %v904 = vadd.f32 0.0, %v903
        %905 = vmatmul.f32.gmra.mxu0 %v839
        %v906 = vpop.f32.mrf.mxu0
        %v907 = vadd.f32 0.0, %v906
        %908 = vmatmul.f32.gmra.mxu0 %v842
        %v909 = vpop.f32.mrf.mxu0
        %v910 = vadd.f32 0.0, %v909
        %911 = vmatmul.f32.gmra.mxu0 %v845
        %v912 = vpop.f32.mrf.mxu0
        %v913 = vadd.f32 0.0, %v912
        %914 = vmatmul.f32.gmra.mxu0 %v848
        %v915 = vpop.f32.mrf.mxu0
        %v916 = vadd.f32 0.0, %v915
        %917 = vmatmul.f32.gmra.mxu0 %v851
        %v918 = vpop.f32.mrf.mxu0
        %v919 = vadd.f32 0.0, %v918
        %920 = vmatmul.f32.gmra.mxu0 %v854
        %v921 = vpop.f32.mrf.mxu0
        %v922 = vadd.f32 0.0, %v921
        %923 = vdwg.mxu0
        %v924 = vadd.f32 %v743, %v877
        %v925 = vadd.f32 %v746, %v880
        %v926 = vadd.f32 %v749, %v883
        %v927 = vadd.f32 %v752, %v886
        %v928 = vadd.f32 %v755, %v889
        %v929 = vadd.f32 %v758, %v892
        %v930 = vadd.f32 %v761, %v895
        %v931 = vadd.f32 %v764, %v898
        %v932 = vadd.f32 %v767, %v901
        %v933 = vadd.f32 %v770, %v904
        %v934 = vadd.f32 %v773, %v907
        %v935 = vadd.f32 %v776, %v910
        %v936 = vadd.f32 %v779, %v913
        %v937 = vadd.f32 %v782, %v916
        %v938 = vadd.f32 %v785, %v919
        %v939 = vadd.f32 %v788, %v922
        %v940 = vld [vmem:[%s485] sm:$0xff]
        %v941 = vld [vmem:[%s485 + $0x8] sm:$0xff]
        %v942 = vld [vmem:[%s485 + $0x18] sm:$0xff]
        %v943 = vld [vmem:[%s485 + $0x20] sm:$0xff]
        %v944 = vld [vmem:[%s485 + $0x30] sm:$0xff]
        %v945 = vld [vmem:[%s485 + $0x38] sm:$0xff]
        %v946 = vld [vmem:[%s485 + $0x48] sm:$0xff]
        %v947 = vld [vmem:[%s485 + $0x50] sm:$0xff]
        %v948 = vld [vmem:[%s485 + $0x60] sm:$0xff]
        %v949 = vld [vmem:[%s485 + $0x68] sm:$0xff]
        %v950 = vld [vmem:[%s485 + $0x78] sm:$0xff]
        %v951 = vld [vmem:[%s485 + $0x80] sm:$0xff]
        %v952 = vld [vmem:[%s485 + $0x90] sm:$0xff]
        %v953 = vld [vmem:[%s485 + $0x98] sm:$0xff]
        %v954 = vld [vmem:[%s485 + $0xa8] sm:$0xff]
        %v955 = vld [vmem:[%s485 + $0xb0] sm:$0xff]
        %s956 = scalar_lea.vmem %s3, 12
        %v957 = vld [vmem:[%s956] sm:$0xf]
        %v959 = vsel %vm486, %v940, 0
        %v962 = vsel %vm486, %v941, 0
        %v965 = vsel %vm486, %v942, 0
        %v968 = vsel %vm486, %v943, 0
        %v971 = vsel %vm486, %v944, 0
        %v974 = vsel %vm486, %v945, 0
        %v977 = vsel %vm486, %v946, 0
        %v980 = vsel %vm486, %v947, 0
        %v983 = vsel %vm486, %v948, 0
        %v986 = vsel %vm486, %v949, 0
        %v989 = vsel %vm486, %v950, 0
        %v992 = vsel %vm486, %v951, 0
        %v995 = vsel %vm486, %v952, 0
        %v998 = vsel %vm486, %v953, 0
        %v1001 = vsel %vm486, %v954, 0
        %v1004 = vsel %vm486, %v955, 0
        %v1007 = vsel %vm605, %v957, 0
        %1009 = vmatpush.msra.mxu0 0.0
        %1010 = vmatpush.msra.mxu0 0.0
        %1011 = vmatpush.msra.mxu0 0.0
        %1012 = vmatpush.msra.mxu0 0.0
        %1013 = vmatpush.msra.mxu0 0.0
        %1014 = vmatpush.msra.mxu0 0.0
        %1015 = vmatpush.msra.mxu0 0.0
        %1016 = vmatpush.msra.mxu0 0.0
        %1017 = vmatpush.msra.mxu0 0.0
        %1018 = vmatpush.msra.mxu0 0.0
        %1019 = vmatpush.msra.mxu0 0.0
        %1020 = vmatpush.msra.mxu0 0.0
        %1021 = vmatpush.msra.mxu0 0.0
        %1022 = vmatpush.msra.mxu0 0.0
        %1023 = vmatpush.msra.mxu0 0.0
        %1024 = vmatpush.msra.mxu0 %v1007
        %1025 = vmatmul.f32.gmra.mxu0 %v959
        %v1026 = vpop.f32.mrf.mxu0
        %v1027 = vadd.f32 0.0, %v1026
        %1028 = vmatmul.f32.gmra.mxu0 %v962
        %v1029 = vpop.f32.mrf.mxu0
        %v1030 = vadd.f32 0.0, %v1029
        %1031 = vmatmul.f32.gmra.mxu0 %v965
        %v1032 = vpop.f32.mrf.mxu0
        %v1033 = vadd.f32 0.0, %v1032
        %1034 = vmatmul.f32.gmra.mxu0 %v968
        %v1035 = vpop.f32.mrf.mxu0
        %v1036 = vadd.f32 0.0, %v1035
        %1037 = vmatmul.f32.gmra.mxu0 %v971
        %v1038 = vpop.f32.mrf.mxu0
        %v1039 = vadd.f32 0.0, %v1038
        %1040 = vmatmul.f32.gmra.mxu0 %v974
        %v1041 = vpop.f32.mrf.mxu0
        %v1042 = vadd.f32 0.0, %v1041
        %1043 = vmatmul.f32.gmra.mxu0 %v977
        %v1044 = vpop.f32.mrf.mxu0
        %v1045 = vadd.f32 0.0, %v1044
        %1046 = vmatmul.f32.gmra.mxu0 %v980
        %v1047 = vpop.f32.mrf.mxu0
        %v1048 = vadd.f32 0.0, %v1047
        %1049 = vmatmul.f32.gmra.mxu0 %v983
        %v1050 = vpop.f32.mrf.mxu0
        %v1051 = vadd.f32 0.0, %v1050
        %1052 = vmatmul.f32.gmra.mxu0 %v986
        %v1053 = vpop.f32.mrf.mxu0
        %v1054 = vadd.f32 0.0, %v1053
        %1055 = vmatmul.f32.gmra.mxu0 %v989
        %v1056 = vpop.f32.mrf.mxu0
        %v1057 = vadd.f32 0.0, %v1056
        %1058 = vmatmul.f32.gmra.mxu0 %v992
        %v1059 = vpop.f32.mrf.mxu0
        %v1060 = vadd.f32 0.0, %v1059
        %1061 = vmatmul.f32.gmra.mxu0 %v995
        %v1062 = vpop.f32.mrf.mxu0
        %v1063 = vadd.f32 0.0, %v1062
        %1064 = vmatmul.f32.gmra.mxu0 %v998
        %v1065 = vpop.f32.mrf.mxu0
        %v1066 = vadd.f32 0.0, %v1065
        %1067 = vmatmul.f32.gmra.mxu0 %v1001
        %v1068 = vpop.f32.mrf.mxu0
        %v1069 = vadd.f32 0.0, %v1068
        %1070 = vmatmul.f32.gmra.mxu0 %v1004
        %v1071 = vpop.f32.mrf.mxu0
        %v1072 = vadd.f32 0.0, %v1071
        %1073 = vdwg.mxu0
        %v1074 = vadd.f32 %v924, %v1027
        %v1075 = vadd.f32 %v925, %v1030
        %v1076 = vadd.f32 %v926, %v1033
        %v1077 = vadd.f32 %v927, %v1036
        %v1078 = vadd.f32 %v928, %v1039
        %v1079 = vadd.f32 %v929, %v1042
        %v1080 = vadd.f32 %v930, %v1045
        %v1081 = vadd.f32 %v931, %v1048
        %v1082 = vadd.f32 %v932, %v1051
        %v1083 = vadd.f32 %v933, %v1054
        %v1084 = vadd.f32 %v934, %v1057
        %v1085 = vadd.f32 %v935, %v1060
        %v1086 = vadd.f32 %v936, %v1063
        %v1087 = vadd.f32 %v937, %v1066
        %v1088 = vadd.f32 %v938, %v1069
        %v1089 = vadd.f32 %v939, %v1072
        %v1090 = vld [vmem:[%s485 + $0x1] sm:$0xff]
        %v1091 = vld [vmem:[%s485 + $0x9] sm:$0xff]
        %v1092 = vld [vmem:[%s485 + $0x19] sm:$0xff]
        %v1093 = vld [vmem:[%s485 + $0x21] sm:$0xff]
        %v1094 = vld [vmem:[%s485 + $0x31] sm:$0xff]
        %v1095 = vld [vmem:[%s485 + $0x39] sm:$0xff]
        %v1096 = vld [vmem:[%s485 + $0x49] sm:$0xff]
        %v1097 = vld [vmem:[%s485 + $0x51] sm:$0xff]
        %v1098 = vld [vmem:[%s485 + $0x61] sm:$0xff]
        %v1099 = vld [vmem:[%s485 + $0x69] sm:$0xff]
        %v1100 = vld [vmem:[%s485 + $0x79] sm:$0xff]
        %v1101 = vld [vmem:[%s485 + $0x81] sm:$0xff]
        %v1102 = vld [vmem:[%s485 + $0x91] sm:$0xff]
        %v1103 = vld [vmem:[%s485 + $0x99] sm:$0xff]
        %v1104 = vld [vmem:[%s485 + $0xa9] sm:$0xff]
        %v1105 = vld [vmem:[%s485 + $0xb1] sm:$0xff]
        %s1106 = scalar_lea.vmem %s3, 16
        %v1107 = vld [vmem:[%s1106] sm:$0xf]
        %v1109 = vsel %vm486, %v1090, 0
        %v1112 = vsel %vm486, %v1091, 0
        %v1115 = vsel %vm486, %v1092, 0
        %v1118 = vsel %vm486, %v1093, 0
        %v1121 = vsel %vm486, %v1094, 0
        %v1124 = vsel %vm486, %v1095, 0
        %v1127 = vsel %vm486, %v1096, 0
        %v1130 = vsel %vm486, %v1097, 0
        %v1133 = vsel %vm486, %v1098, 0
        %v1136 = vsel %vm486, %v1099, 0
        %v1139 = vsel %vm486, %v1100, 0
        %v1142 = vsel %vm486, %v1101, 0
        %v1145 = vsel %vm486, %v1102, 0
        %v1148 = vsel %vm486, %v1103, 0
        %v1151 = vsel %vm486, %v1104, 0
        %v1154 = vsel %vm486, %v1105, 0
        %v1157 = vsel %vm605, %v1107, 0
        %1159 = vmatpush.msra.mxu0 0.0
        %1160 = vmatpush.msra.mxu0 0.0
        %1161 = vmatpush.msra.mxu0 0.0
        %1162 = vmatpush.msra.mxu0 0.0
        %1163 = vmatpush.msra.mxu0 0.0
        %1164 = vmatpush.msra.mxu0 0.0
        %1165 = vmatpush.msra.mxu0 0.0
        %1166 = vmatpush.msra.mxu0 0.0
        %1167 = vmatpush.msra.mxu0 0.0
        %1168 = vmatpush.msra.mxu0 0.0
        %1169 = vmatpush.msra.mxu0 0.0
        %1170 = vmatpush.msra.mxu0 0.0
        %1171 = vmatpush.msra.mxu0 0.0
        %1172 = vmatpush.msra.mxu0 0.0
        %1173 = vmatpush.msra.mxu0 0.0
        %1174 = vmatpush.msra.mxu0 %v1157
        %1175 = vmatmul.f32.gmra.mxu0 %v1109
        %v1176 = vpop.f32.mrf.mxu0
        %v1177 = vadd.f32 0.0, %v1176
        %1178 = vmatmul.f32.gmra.mxu0 %v1112
        %v1179 = vpop.f32.mrf.mxu0
        %v1180 = vadd.f32 0.0, %v1179
        %1181 = vmatmul.f32.gmra.mxu0 %v1115
        %v1182 = vpop.f32.mrf.mxu0
        %v1183 = vadd.f32 0.0, %v1182
        %1184 = vmatmul.f32.gmra.mxu0 %v1118
        %v1185 = vpop.f32.mrf.mxu0
        %v1186 = vadd.f32 0.0, %v1185
        %1187 = vmatmul.f32.gmra.mxu0 %v1121
        %v1188 = vpop.f32.mrf.mxu0
        %v1189 = vadd.f32 0.0, %v1188
        %1190 = vmatmul.f32.gmra.mxu0 %v1124
        %v1191 = vpop.f32.mrf.mxu0
        %v1192 = vadd.f32 0.0, %v1191
        %1193 = vmatmul.f32.gmra.mxu0 %v1127
        %v1194 = vpop.f32.mrf.mxu0
        %v1195 = vadd.f32 0.0, %v1194
        %1196 = vmatmul.f32.gmra.mxu0 %v1130
        %v1197 = vpop.f32.mrf.mxu0
        %v1198 = vadd.f32 0.0, %v1197
        %1199 = vmatmul.f32.gmra.mxu0 %v1133
        %v1200 = vpop.f32.mrf.mxu0
        %v1201 = vadd.f32 0.0, %v1200
        %1202 = vmatmul.f32.gmra.mxu0 %v1136
        %v1203 = vpop.f32.mrf.mxu0
        %v1204 = vadd.f32 0.0, %v1203
        %1205 = vmatmul.f32.gmra.mxu0 %v1139
        %v1206 = vpop.f32.mrf.mxu0
        %v1207 = vadd.f32 0.0, %v1206
        %1208 = vmatmul.f32.gmra.mxu0 %v1142
        %v1209 = vpop.f32.mrf.mxu0
        %v1210 = vadd.f32 0.0, %v1209
        %1211 = vmatmul.f32.gmra.mxu0 %v1145
        %v1212 = vpop.f32.mrf.mxu0
        %v1213 = vadd.f32 0.0, %v1212
        %1214 = vmatmul.f32.gmra.mxu0 %v1148
        %v1215 = vpop.f32.mrf.mxu0
        %v1216 = vadd.f32 0.0, %v1215
        %1217 = vmatmul.f32.gmra.mxu0 %v1151
        %v1218 = vpop.f32.mrf.mxu0
        %v1219 = vadd.f32 0.0, %v1218
        %1220 = vmatmul.f32.gmra.mxu0 %v1154
        %v1221 = vpop.f32.mrf.mxu0
        %v1222 = vadd.f32 0.0, %v1221
        %1223 = vdwg.mxu0
        %v1224 = vadd.f32 %v1074, %v1177
        %v1225 = vadd.f32 %v1075, %v1180
        %v1226 = vadd.f32 %v1076, %v1183
        %v1227 = vadd.f32 %v1077, %v1186
        %v1228 = vadd.f32 %v1078, %v1189
        %v1229 = vadd.f32 %v1079, %v1192
        %v1230 = vadd.f32 %v1080, %v1195
        %v1231 = vadd.f32 %v1081, %v1198
        %v1232 = vadd.f32 %v1082, %v1201
        %v1233 = vadd.f32 %v1083, %v1204
        %v1234 = vadd.f32 %v1084, %v1207
        %v1235 = vadd.f32 %v1085, %v1210
        %v1236 = vadd.f32 %v1086, %v1213
        %v1237 = vadd.f32 %v1087, %v1216
        %v1238 = vadd.f32 %v1088, %v1219
        %v1239 = vadd.f32 %v1089, %v1222
        %v1240 = vld [vmem:[%s485 + $0x2] sm:$0xff]
        %v1241 = vld [vmem:[%s485 + $0xa] sm:$0xff]
        %v1242 = vld [vmem:[%s485 + $0x1a] sm:$0xff]
        %v1243 = vld [vmem:[%s485 + $0x22] sm:$0xff]
        %v1244 = vld [vmem:[%s485 + $0x32] sm:$0xff]
        %v1245 = vld [vmem:[%s485 + $0x3a] sm:$0xff]
        %v1246 = vld [vmem:[%s485 + $0x4a] sm:$0xff]
        %v1247 = vld [vmem:[%s485 + $0x52] sm:$0xff]
        %v1248 = vld [vmem:[%s485 + $0x62] sm:$0xff]
        %v1249 = vld [vmem:[%s485 + $0x6a] sm:$0xff]
        %v1250 = vld [vmem:[%s485 + $0x7a] sm:$0xff]
        %v1251 = vld [vmem:[%s485 + $0x82] sm:$0xff]
        %v1252 = vld [vmem:[%s485 + $0x92] sm:$0xff]
        %v1253 = vld [vmem:[%s485 + $0x9a] sm:$0xff]
        %v1254 = vld [vmem:[%s485 + $0xaa] sm:$0xff]
        %v1255 = vld [vmem:[%s485 + $0xb2] sm:$0xff]
        %s1256 = scalar_lea.vmem %s3, 20
        %v1257 = vld [vmem:[%s1256] sm:$0xf]
        %v1259 = vsel %vm486, %v1240, 0
        %v1262 = vsel %vm486, %v1241, 0
        %v1265 = vsel %vm486, %v1242, 0
        %v1268 = vsel %vm486, %v1243, 0
        %v1271 = vsel %vm486, %v1244, 0
        %v1274 = vsel %vm486, %v1245, 0
        %v1277 = vsel %vm486, %v1246, 0
        %v1280 = vsel %vm486, %v1247, 0
        %v1283 = vsel %vm486, %v1248, 0
        %v1286 = vsel %vm486, %v1249, 0
        %v1289 = vsel %vm486, %v1250, 0
        %v1292 = vsel %vm486, %v1251, 0
        %v1295 = vsel %vm486, %v1252, 0
        %v1298 = vsel %vm486, %v1253, 0
        %v1301 = vsel %vm486, %v1254, 0
        %v1304 = vsel %vm486, %v1255, 0
        %v1307 = vsel %vm605, %v1257, 0
        %1309 = vmatpush.msra.mxu0 0.0
        %1310 = vmatpush.msra.mxu0 0.0
        %1311 = vmatpush.msra.mxu0 0.0
        %1312 = vmatpush.msra.mxu0 0.0
        %1313 = vmatpush.msra.mxu0 0.0
        %1314 = vmatpush.msra.mxu0 0.0
        %1315 = vmatpush.msra.mxu0 0.0
        %1316 = vmatpush.msra.mxu0 0.0
        %1317 = vmatpush.msra.mxu0 0.0
        %1318 = vmatpush.msra.mxu0 0.0
        %1319 = vmatpush.msra.mxu0 0.0
        %1320 = vmatpush.msra.mxu0 0.0
        %1321 = vmatpush.msra.mxu0 0.0
        %1322 = vmatpush.msra.mxu0 0.0
        %1323 = vmatpush.msra.mxu0 0.0
        %1324 = vmatpush.msra.mxu0 %v1307
        %1325 = vmatmul.f32.gmra.mxu0 %v1259
        %v1326 = vpop.f32.mrf.mxu0
        %v1327 = vadd.f32 0.0, %v1326
        %1328 = vmatmul.f32.gmra.mxu0 %v1262
        %v1329 = vpop.f32.mrf.mxu0
        %v1330 = vadd.f32 0.0, %v1329
        %1331 = vmatmul.f32.gmra.mxu0 %v1265
        %v1332 = vpop.f32.mrf.mxu0
        %v1333 = vadd.f32 0.0, %v1332
        %1334 = vmatmul.f32.gmra.mxu0 %v1268
        %v1335 = vpop.f32.mrf.mxu0
        %v1336 = vadd.f32 0.0, %v1335
        %1337 = vmatmul.f32.gmra.mxu0 %v1271
        %v1338 = vpop.f32.mrf.mxu0
        %v1339 = vadd.f32 0.0, %v1338
        %1340 = vmatmul.f32.gmra.mxu0 %v1274
        %v1341 = vpop.f32.mrf.mxu0
        %v1342 = vadd.f32 0.0, %v1341
        %1343 = vmatmul.f32.gmra.mxu0 %v1277
        %v1344 = vpop.f32.mrf.mxu0
        %v1345 = vadd.f32 0.0, %v1344
        %1346 = vmatmul.f32.gmra.mxu0 %v1280
        %v1347 = vpop.f32.mrf.mxu0
        %v1348 = vadd.f32 0.0, %v1347
        %1349 = vmatmul.f32.gmra.mxu0 %v1283
        %v1350 = vpop.f32.mrf.mxu0
        %v1351 = vadd.f32 0.0, %v1350
        %1352 = vmatmul.f32.gmra.mxu0 %v1286
        %v1353 = vpop.f32.mrf.mxu0
        %v1354 = vadd.f32 0.0, %v1353
        %1355 = vmatmul.f32.gmra.mxu0 %v1289
        %v1356 = vpop.f32.mrf.mxu0
        %v1357 = vadd.f32 0.0, %v1356
        %1358 = vmatmul.f32.gmra.mxu0 %v1292
        %v1359 = vpop.f32.mrf.mxu0
        %v1360 = vadd.f32 0.0, %v1359
        %1361 = vmatmul.f32.gmra.mxu0 %v1295
        %v1362 = vpop.f32.mrf.mxu0
        %v1363 = vadd.f32 0.0, %v1362
        %1364 = vmatmul.f32.gmra.mxu0 %v1298
        %v1365 = vpop.f32.mrf.mxu0
        %v1366 = vadd.f32 0.0, %v1365
        %1367 = vmatmul.f32.gmra.mxu0 %v1301
        %v1368 = vpop.f32.mrf.mxu0
        %v1369 = vadd.f32 0.0, %v1368
        %1370 = vmatmul.f32.gmra.mxu0 %v1304
        %v1371 = vpop.f32.mrf.mxu0
        %v1372 = vadd.f32 0.0, %v1371
        %1373 = vdwg.mxu0
        %v1374 = vadd.f32 %v1224, %v1327
        %v1375 = vadd.f32 %v1225, %v1330
        %v1376 = vadd.f32 %v1226, %v1333
        %v1377 = vadd.f32 %v1227, %v1336
        %v1378 = vadd.f32 %v1228, %v1339
        %v1379 = vadd.f32 %v1229, %v1342
        %v1380 = vadd.f32 %v1230, %v1345
        %v1381 = vadd.f32 %v1231, %v1348
        %v1382 = vadd.f32 %v1232, %v1351
        %v1383 = vadd.f32 %v1233, %v1354
        %v1384 = vadd.f32 %v1234, %v1357
        %v1385 = vadd.f32 %v1235, %v1360
        %v1386 = vadd.f32 %v1236, %v1363
        %v1387 = vadd.f32 %v1237, %v1366
        %v1388 = vadd.f32 %v1238, %v1369
        %v1389 = vadd.f32 %v1239, %v1372
        %s1390 = scalar_lea.vmem [#allocation2], 48
        %v1391 = vld [vmem:[%s1390] sm:$0xff]
        %v1392 = vld [vmem:[%s1390 + $0x8] sm:$0xff]
        %v1393 = vld [vmem:[%s1390 + $0x18] sm:$0xff]
        %v1394 = vld [vmem:[%s1390 + $0x20] sm:$0xff]
        %v1395 = vld [vmem:[%s1390 + $0x30] sm:$0xff]
        %v1396 = vld [vmem:[%s1390 + $0x38] sm:$0xff]
        %v1397 = vld [vmem:[%s1390 + $0x48] sm:$0xff]
        %v1398 = vld [vmem:[%s1390 + $0x50] sm:$0xff]
        %v1399 = vld [vmem:[%s1390 + $0x60] sm:$0xff]
        %v1400 = vld [vmem:[%s1390 + $0x68] sm:$0xff]
        %v1401 = vld [vmem:[%s1390 + $0x78] sm:$0xff]
        %v1402 = vld [vmem:[%s1390 + $0x80] sm:$0xff]
        %v1403 = vld [vmem:[%s1390 + $0x90] sm:$0xff]
        %v1404 = vld [vmem:[%s1390 + $0x98] sm:$0xff]
        %v1405 = vld [vmem:[%s1390 + $0xa8] sm:$0xff]
        %v1406 = vld [vmem:[%s1390 + $0xb0] sm:$0xff]
        %s1407 = scalar_lea.vmem %s3, 24
        %v1408 = vld [vmem:[%s1407] sm:$0xf]
        %v1410 = vsel %vm486, %v1391, 0
        %v1413 = vsel %vm486, %v1392, 0
        %v1416 = vsel %vm486, %v1393, 0
        %v1419 = vsel %vm486, %v1394, 0
        %v1422 = vsel %vm486, %v1395, 0
        %v1425 = vsel %vm486, %v1396, 0
        %v1428 = vsel %vm486, %v1397, 0
        %v1431 = vsel %vm486, %v1398, 0
        %v1434 = vsel %vm486, %v1399, 0
        %v1437 = vsel %vm486, %v1400, 0
        %v1440 = vsel %vm486, %v1401, 0
        %v1443 = vsel %vm486, %v1402, 0
        %v1446 = vsel %vm486, %v1403, 0
        %v1449 = vsel %vm486, %v1404, 0
        %v1452 = vsel %vm486, %v1405, 0
        %v1455 = vsel %vm486, %v1406, 0
        %v1458 = vsel %vm605, %v1408, 0
        %1460 = vmatpush.msra.mxu0 0.0
        %1461 = vmatpush.msra.mxu0 0.0
        %1462 = vmatpush.msra.mxu0 0.0
        %1463 = vmatpush.msra.mxu0 0.0
        %1464 = vmatpush.msra.mxu0 0.0
        %1465 = vmatpush.msra.mxu0 0.0
        %1466 = vmatpush.msra.mxu0 0.0
        %1467 = vmatpush.msra.mxu0 0.0
        %1468 = vmatpush.msra.mxu0 0.0
        %1469 = vmatpush.msra.mxu0 0.0
        %1470 = vmatpush.msra.mxu0 0.0
        %1471 = vmatpush.msra.mxu0 0.0
        %1472 = vmatpush.msra.mxu0 0.0
        %1473 = vmatpush.msra.mxu0 0.0
        %1474 = vmatpush.msra.mxu0 0.0
        %1475 = vmatpush.msra.mxu0 %v1458
        %1476 = vmatmul.f32.gmra.mxu0 %v1410
        %v1477 = vpop.f32.mrf.mxu0
        %v1478 = vadd.f32 0.0, %v1477
        %1479 = vmatmul.f32.gmra.mxu0 %v1413
        %v1480 = vpop.f32.mrf.mxu0
        %v1481 = vadd.f32 0.0, %v1480
        %1482 = vmatmul.f32.gmra.mxu0 %v1416
        %v1483 = vpop.f32.mrf.mxu0
        %v1484 = vadd.f32 0.0, %v1483
        %1485 = vmatmul.f32.gmra.mxu0 %v1419
        %v1486 = vpop.f32.mrf.mxu0
        %v1487 = vadd.f32 0.0, %v1486
        %1488 = vmatmul.f32.gmra.mxu0 %v1422
        %v1489 = vpop.f32.mrf.mxu0
        %v1490 = vadd.f32 0.0, %v1489
        %1491 = vmatmul.f32.gmra.mxu0 %v1425
        %v1492 = vpop.f32.mrf.mxu0
        %v1493 = vadd.f32 0.0, %v1492
        %1494 = vmatmul.f32.gmra.mxu0 %v1428
        %v1495 = vpop.f32.mrf.mxu0
        %v1496 = vadd.f32 0.0, %v1495
        %1497 = vmatmul.f32.gmra.mxu0 %v1431
        %v1498 = vpop.f32.mrf.mxu0
        %v1499 = vadd.f32 0.0, %v1498
        %1500 = vmatmul.f32.gmra.mxu0 %v1434
        %v1501 = vpop.f32.mrf.mxu0
        %v1502 = vadd.f32 0.0, %v1501
        %1503 = vmatmul.f32.gmra.mxu0 %v1437
        %v1504 = vpop.f32.mrf.mxu0
        %v1505 = vadd.f32 0.0, %v1504
        %1506 = vmatmul.f32.gmra.mxu0 %v1440
        %v1507 = vpop.f32.mrf.mxu0
        %v1508 = vadd.f32 0.0, %v1507
        %1509 = vmatmul.f32.gmra.mxu0 %v1443
        %v1510 = vpop.f32.mrf.mxu0
        %v1511 = vadd.f32 0.0, %v1510
        %1512 = vmatmul.f32.gmra.mxu0 %v1446
        %v1513 = vpop.f32.mrf.mxu0
        %v1514 = vadd.f32 0.0, %v1513
        %1515 = vmatmul.f32.gmra.mxu0 %v1449
        %v1516 = vpop.f32.mrf.mxu0
        %v1517 = vadd.f32 0.0, %v1516
        %1518 = vmatmul.f32.gmra.mxu0 %v1452
        %v1519 = vpop.f32.mrf.mxu0
        %v1520 = vadd.f32 0.0, %v1519
        %1521 = vmatmul.f32.gmra.mxu0 %v1455
        %v1522 = vpop.f32.mrf.mxu0
        %v1523 = vadd.f32 0.0, %v1522
        %1524 = vdwg.mxu0
        %v1525 = vadd.f32 %v1374, %v1478
        %v1526 = vadd.f32 %v1375, %v1481
        %v1527 = vadd.f32 %v1376, %v1484
        %v1528 = vadd.f32 %v1377, %v1487
        %v1529 = vadd.f32 %v1378, %v1490
        %v1530 = vadd.f32 %v1379, %v1493
        %v1531 = vadd.f32 %v1380, %v1496
        %v1532 = vadd.f32 %v1381, %v1499
        %v1533 = vadd.f32 %v1382, %v1502
        %v1534 = vadd.f32 %v1383, %v1505
        %v1535 = vadd.f32 %v1384, %v1508
        %v1536 = vadd.f32 %v1385, %v1511
        %v1537 = vadd.f32 %v1386, %v1514
        %v1538 = vadd.f32 %v1387, %v1517
        %v1539 = vadd.f32 %v1388, %v1520
        %v1540 = vadd.f32 %v1389, %v1523
        %v1541 = vld [vmem:[%s1390 + $0x1] sm:$0xff]
        %v1542 = vld [vmem:[%s1390 + $0x9] sm:$0xff]
        %v1543 = vld [vmem:[%s1390 + $0x19] sm:$0xff]
        %v1544 = vld [vmem:[%s1390 + $0x21] sm:$0xff]
        %v1545 = vld [vmem:[%s1390 + $0x31] sm:$0xff]
        %v1546 = vld [vmem:[%s1390 + $0x39] sm:$0xff]
        %v1547 = vld [vmem:[%s1390 + $0x49] sm:$0xff]
        %v1548 = vld [vmem:[%s1390 + $0x51] sm:$0xff]
        %v1549 = vld [vmem:[%s1390 + $0x61] sm:$0xff]
        %v1550 = vld [vmem:[%s1390 + $0x69] sm:$0xff]
        %v1551 = vld [vmem:[%s1390 + $0x79] sm:$0xff]
        %v1552 = vld [vmem:[%s1390 + $0x81] sm:$0xff]
        %v1553 = vld [vmem:[%s1390 + $0x91] sm:$0xff]
        %v1554 = vld [vmem:[%s1390 + $0x99] sm:$0xff]
        %v1555 = vld [vmem:[%s1390 + $0xa9] sm:$0xff]
        %v1556 = vld [vmem:[%s1390 + $0xb1] sm:$0xff]
        %s1557 = scalar_lea.vmem %s3, 28
        %v1558 = vld [vmem:[%s1557] sm:$0xf]
        %v1560 = vsel %vm486, %v1541, 0
        %v1563 = vsel %vm486, %v1542, 0
        %v1566 = vsel %vm486, %v1543, 0
        %v1569 = vsel %vm486, %v1544, 0
        %v1572 = vsel %vm486, %v1545, 0
        %v1575 = vsel %vm486, %v1546, 0
        %v1578 = vsel %vm486, %v1547, 0
        %v1581 = vsel %vm486, %v1548, 0
        %v1584 = vsel %vm486, %v1549, 0
        %v1587 = vsel %vm486, %v1550, 0
        %v1590 = vsel %vm486, %v1551, 0
        %v1593 = vsel %vm486, %v1552, 0
        %v1596 = vsel %vm486, %v1553, 0
        %v1599 = vsel %vm486, %v1554, 0
        %v1602 = vsel %vm486, %v1555, 0
        %v1605 = vsel %vm486, %v1556, 0
        %v1608 = vsel %vm605, %v1558, 0
        %1610 = vmatpush.msra.mxu0 0.0
        %1611 = vmatpush.msra.mxu0 0.0
        %1612 = vmatpush.msra.mxu0 0.0
        %1613 = vmatpush.msra.mxu0 0.0
        %1614 = vmatpush.msra.mxu0 0.0
        %1615 = vmatpush.msra.mxu0 0.0
        %1616 = vmatpush.msra.mxu0 0.0
        %1617 = vmatpush.msra.mxu0 0.0
        %1618 = vmatpush.msra.mxu0 0.0
        %1619 = vmatpush.msra.mxu0 0.0
        %1620 = vmatpush.msra.mxu0 0.0
        %1621 = vmatpush.msra.mxu0 0.0
        %1622 = vmatpush.msra.mxu0 0.0
        %1623 = vmatpush.msra.mxu0 0.0
        %1624 = vmatpush.msra.mxu0 0.0
        %1625 = vmatpush.msra.mxu0 %v1608
        %1626 = vmatmul.f32.gmra.mxu0 %v1560
        %v1627 = vpop.f32.mrf.mxu0
        %v1628 = vadd.f32 0.0, %v1627
        %1629 = vmatmul.f32.gmra.mxu0 %v1563
        %v1630 = vpop.f32.mrf.mxu0
        %v1631 = vadd.f32 0.0, %v1630
        %1632 = vmatmul.f32.gmra.mxu0 %v1566
        %v1633 = vpop.f32.mrf.mxu0
        %v1634 = vadd.f32 0.0, %v1633
        %1635 = vmatmul.f32.gmra.mxu0 %v1569
        %v1636 = vpop.f32.mrf.mxu0
        %v1637 = vadd.f32 0.0, %v1636
        %1638 = vmatmul.f32.gmra.mxu0 %v1572
        %v1639 = vpop.f32.mrf.mxu0
        %v1640 = vadd.f32 0.0, %v1639
        %1641 = vmatmul.f32.gmra.mxu0 %v1575
        %v1642 = vpop.f32.mrf.mxu0
        %v1643 = vadd.f32 0.0, %v1642
        %1644 = vmatmul.f32.gmra.mxu0 %v1578
        %v1645 = vpop.f32.mrf.mxu0
        %v1646 = vadd.f32 0.0, %v1645
        %1647 = vmatmul.f32.gmra.mxu0 %v1581
        %v1648 = vpop.f32.mrf.mxu0
        %v1649 = vadd.f32 0.0, %v1648
        %1650 = vmatmul.f32.gmra.mxu0 %v1584
        %v1651 = vpop.f32.mrf.mxu0
        %v1652 = vadd.f32 0.0, %v1651
        %1653 = vmatmul.f32.gmra.mxu0 %v1587
        %v1654 = vpop.f32.mrf.mxu0
        %v1655 = vadd.f32 0.0, %v1654
        %1656 = vmatmul.f32.gmra.mxu0 %v1590
        %v1657 = vpop.f32.mrf.mxu0
        %v1658 = vadd.f32 0.0, %v1657
        %1659 = vmatmul.f32.gmra.mxu0 %v1593
        %v1660 = vpop.f32.mrf.mxu0
        %v1661 = vadd.f32 0.0, %v1660
        %1662 = vmatmul.f32.gmra.mxu0 %v1596
        %v1663 = vpop.f32.mrf.mxu0
        %v1664 = vadd.f32 0.0, %v1663
        %1665 = vmatmul.f32.gmra.mxu0 %v1599
        %v1666 = vpop.f32.mrf.mxu0
        %v1667 = vadd.f32 0.0, %v1666
        %1668 = vmatmul.f32.gmra.mxu0 %v1602
        %v1669 = vpop.f32.mrf.mxu0
        %v1670 = vadd.f32 0.0, %v1669
        %1671 = vmatmul.f32.gmra.mxu0 %v1605
        %v1672 = vpop.f32.mrf.mxu0
        %v1673 = vadd.f32 0.0, %v1672
        %1674 = vdwg.mxu0
        %v1675 = vadd.f32 %v1525, %v1628
        %v1676 = vadd.f32 %v1526, %v1631
        %v1677 = vadd.f32 %v1527, %v1634
        %v1678 = vadd.f32 %v1528, %v1637
        %v1679 = vadd.f32 %v1529, %v1640
        %v1680 = vadd.f32 %v1530, %v1643
        %v1681 = vadd.f32 %v1531, %v1646
        %v1682 = vadd.f32 %v1532, %v1649
        %v1683 = vadd.f32 %v1533, %v1652
        %v1684 = vadd.f32 %v1534, %v1655
        %v1685 = vadd.f32 %v1535, %v1658
        %v1686 = vadd.f32 %v1536, %v1661
        %v1687 = vadd.f32 %v1537, %v1664
        %v1688 = vadd.f32 %v1538, %v1667
        %v1689 = vadd.f32 %v1539, %v1670
        %v1690 = vadd.f32 %v1540, %v1673
        %v1691 = vld [vmem:[%s1390 + $0x2] sm:$0xff]
        %v1692 = vld [vmem:[%s1390 + $0xa] sm:$0xff]
        %v1693 = vld [vmem:[%s1390 + $0x1a] sm:$0xff]
        %v1694 = vld [vmem:[%s1390 + $0x22] sm:$0xff]
        %v1695 = vld [vmem:[%s1390 + $0x32] sm:$0xff]
        %v1696 = vld [vmem:[%s1390 + $0x3a] sm:$0xff]
        %v1697 = vld [vmem:[%s1390 + $0x4a] sm:$0xff]
        %v1698 = vld [vmem:[%s1390 + $0x52] sm:$0xff]
        %v1699 = vld [vmem:[%s1390 + $0x62] sm:$0xff]
        %v1700 = vld [vmem:[%s1390 + $0x6a] sm:$0xff]
        %v1701 = vld [vmem:[%s1390 + $0x7a] sm:$0xff]
        %v1702 = vld [vmem:[%s1390 + $0x82] sm:$0xff]
        %v1703 = vld [vmem:[%s1390 + $0x92] sm:$0xff]
        %v1704 = vld [vmem:[%s1390 + $0x9a] sm:$0xff]
        %v1705 = vld [vmem:[%s1390 + $0xaa] sm:$0xff]
        %v1706 = vld [vmem:[%s1390 + $0xb2] sm:$0xff]
        %s1707 = scalar_lea.vmem %s3, 32
        %v1708 = vld [vmem:[%s1707] sm:$0xf]
        %v1710 = vsel %vm486, %v1691, 0
        %v1713 = vsel %vm486, %v1692, 0
        %v1716 = vsel %vm486, %v1693, 0
        %v1719 = vsel %vm486, %v1694, 0
        %v1722 = vsel %vm486, %v1695, 0
        %v1725 = vsel %vm486, %v1696, 0
        %v1728 = vsel %vm486, %v1697, 0
        %v1731 = vsel %vm486, %v1698, 0
        %v1734 = vsel %vm486, %v1699, 0
        %v1737 = vsel %vm486, %v1700, 0
        %v1740 = vsel %vm486, %v1701, 0
        %v1743 = vsel %vm486, %v1702, 0
        %v1746 = vsel %vm486, %v1703, 0
        %v1749 = vsel %vm486, %v1704, 0
        %v1752 = vsel %vm486, %v1705, 0
        %v1755 = vsel %vm486, %v1706, 0
        %v1758 = vsel %vm605, %v1708, 0
        %1760 = vmatpush.msra.mxu0 0.0
        %1761 = vmatpush.msra.mxu0 0.0
        %1762 = vmatpush.msra.mxu0 0.0
        %1763 = vmatpush.msra.mxu0 0.0
        %1764 = vmatpush.msra.mxu0 0.0
        %1765 = vmatpush.msra.mxu0 0.0
        %1766 = vmatpush.msra.mxu0 0.0
        %1767 = vmatpush.msra.mxu0 0.0
        %1768 = vmatpush.msra.mxu0 0.0
        %1769 = vmatpush.msra.mxu0 0.0
        %1770 = vmatpush.msra.mxu0 0.0
        %1771 = vmatpush.msra.mxu0 0.0
        %1772 = vmatpush.msra.mxu0 0.0
        %1773 = vmatpush.msra.mxu0 0.0
        %1774 = vmatpush.msra.mxu0 0.0
        %1775 = vmatpush.msra.mxu0 %v1758
        %1776 = vmatmul.f32.gmra.mxu0 %v1710
        %v1777 = vpop.f32.mrf.mxu0
        %v1778 = vadd.f32 0.0, %v1777
        %1779 = vmatmul.f32.gmra.mxu0 %v1713
        %v1780 = vpop.f32.mrf.mxu0
        %v1781 = vadd.f32 0.0, %v1780
        %1782 = vmatmul.f32.gmra.mxu0 %v1716
        %v1783 = vpop.f32.mrf.mxu0
        %v1784 = vadd.f32 0.0, %v1783
        %1785 = vmatmul.f32.gmra.mxu0 %v1719
        %v1786 = vpop.f32.mrf.mxu0
        %v1787 = vadd.f32 0.0, %v1786
        %1788 = vmatmul.f32.gmra.mxu0 %v1722
        %v1789 = vpop.f32.mrf.mxu0
        %v1790 = vadd.f32 0.0, %v1789
        %1791 = vmatmul.f32.gmra.mxu0 %v1725
        %v1792 = vpop.f32.mrf.mxu0
        %v1793 = vadd.f32 0.0, %v1792
        %1794 = vmatmul.f32.gmra.mxu0 %v1728
        %v1795 = vpop.f32.mrf.mxu0
        %v1796 = vadd.f32 0.0, %v1795
        %1797 = vmatmul.f32.gmra.mxu0 %v1731
        %v1798 = vpop.f32.mrf.mxu0
        %v1799 = vadd.f32 0.0, %v1798
        %1800 = vmatmul.f32.gmra.mxu0 %v1734
        %v1801 = vpop.f32.mrf.mxu0
        %v1802 = vadd.f32 0.0, %v1801
        %1803 = vmatmul.f32.gmra.mxu0 %v1737
        %v1804 = vpop.f32.mrf.mxu0
        %v1805 = vadd.f32 0.0, %v1804
        %1806 = vmatmul.f32.gmra.mxu0 %v1740
        %v1807 = vpop.f32.mrf.mxu0
        %v1808 = vadd.f32 0.0, %v1807
        %1809 = vmatmul.f32.gmra.mxu0 %v1743
        %v1810 = vpop.f32.mrf.mxu0
        %v1811 = vadd.f32 0.0, %v1810
        %1812 = vmatmul.f32.gmra.mxu0 %v1746
        %v1813 = vpop.f32.mrf.mxu0
        %v1814 = vadd.f32 0.0, %v1813
        %1815 = vmatmul.f32.gmra.mxu0 %v1749
        %v1816 = vpop.f32.mrf.mxu0
        %v1817 = vadd.f32 0.0, %v1816
        %1818 = vmatmul.f32.gmra.mxu0 %v1752
        %v1819 = vpop.f32.mrf.mxu0
        %v1820 = vadd.f32 0.0, %v1819
        %1821 = vmatmul.f32.gmra.mxu0 %v1755
        %v1822 = vpop.f32.mrf.mxu0
        %v1823 = vadd.f32 0.0, %v1822
        %1824 = vdwg.mxu0
        %v1825 = vadd.f32 %v1675, %v1778
        %v1826 = vadd.f32 %v1676, %v1781
        %v1827 = vadd.f32 %v1677, %v1784
        %v1828 = vadd.f32 %v1678, %v1787
        %v1829 = vadd.f32 %v1679, %v1790
        %v1830 = vadd.f32 %v1680, %v1793
        %v1831 = vadd.f32 %v1681, %v1796
        %v1832 = vadd.f32 %v1682, %v1799
        %v1833 = vadd.f32 %v1683, %v1802
        %v1834 = vadd.f32 %v1684, %v1805
        %v1835 = vadd.f32 %v1685, %v1808
        %v1836 = vadd.f32 %v1686, %v1811
        %v1837 = vadd.f32 %v1687, %v1814
        %v1838 = vadd.f32 %v1688, %v1817
        %v1839 = vadd.f32 %v1689, %v1820
        %v1840 = vadd.f32 %v1690, %v1823
        %v1841 = vadd.f32 %v1825, %v1826
        %v1842 = vadd.f32 %v1841, %v1827
        %v1843 = vadd.f32 %v1842, %v1828
        %v1844 = vadd.f32 %v1843, %v1829
        %v1845 = vadd.f32 %v1844, %v1830
        %v1846 = vadd.f32 %v1845, %v1831
        %v1847 = vadd.f32 %v1846, %v1832
        %v1848 = vadd.f32 %v1847, %v1833
        %v1849 = vadd.f32 %v1848, %v1834
        %v1850 = vadd.f32 %v1849, %v1835
        %v1851 = vadd.f32 %v1850, %v1836
        %v1852 = vadd.f32 %v1851, %v1837
        %v1853 = vadd.f32 %v1852, %v1838
        %v1854 = vadd.f32 %v1853, %v1839
        %v1855 = vadd.f32 %v1854, %v1840
        %v1856 = vrot.slane %v1855, 4
        %v1857 = vadd.f32 %v1855, %v1856
        %v1858 = vrot.slane %v1857, 2
        %v1859 = vadd.f32 %v1857, %v1858
        %v1860 = vrot.slane %v1859, 1
        %v1861 = vadd.f32 %v1859, %v1860
        %1862 = vst [vmem:[%s401] sm:$0x1] %v1861
        %v1863 = vmul.f32 %v1825, %v1825
        %v1864 = vmul.f32 %v1826, %v1826
        %v1865 = vmul.f32 %v1827, %v1827
        %v1866 = vmul.f32 %v1828, %v1828
        %v1867 = vmul.f32 %v1829, %v1829
        %v1868 = vmul.f32 %v1830, %v1830
        %v1869 = vmul.f32 %v1831, %v1831
        %v1870 = vmul.f32 %v1832, %v1832
        %v1871 = vmul.f32 %v1833, %v1833
        %v1872 = vmul.f32 %v1834, %v1834
        %v1873 = vmul.f32 %v1835, %v1835
        %v1874 = vmul.f32 %v1836, %v1836
        %v1875 = vmul.f32 %v1837, %v1837
        %v1876 = vmul.f32 %v1838, %v1838
        %v1877 = vmul.f32 %v1839, %v1839
        %v1878 = vmul.f32 %v1840, %v1840
        %v1879 = vadd.f32 %v1863, %v1864
        %v1880 = vadd.f32 %v1879, %v1865
        %v1881 = vadd.f32 %v1880, %v1866
        %v1882 = vadd.f32 %v1881, %v1867
        %v1883 = vadd.f32 %v1882, %v1868
        %v1884 = vadd.f32 %v1883, %v1869
        %v1885 = vadd.f32 %v1884, %v1870
        %v1886 = vadd.f32 %v1885, %v1871
        %v1887 = vadd.f32 %v1886, %v1872
        %v1888 = vadd.f32 %v1887, %v1873
        %v1889 = vadd.f32 %v1888, %v1874
        %v1890 = vadd.f32 %v1889, %v1875
        %v1891 = vadd.f32 %v1890, %v1876
        %v1892 = vadd.f32 %v1891, %v1877
        %v1893 = vadd.f32 %v1892, %v1878
        %v1894 = vrot.slane %v1893, 4
        %v1895 = vadd.f32 %v1893, %v1894
        %v1896 = vrot.slane %v1895, 2
        %v1897 = vadd.f32 %v1895, %v1896
        %v1898 = vrot.slane %v1897, 1
        %v1899 = vadd.f32 %v1897, %v1898
        %1900 = vst [vmem:[%s401 + $0x1] sm:$0x1] %v1899
        %1901 = vst [vmem:[%s394] sm:$0xff] %v1825
        %1902 = vst [vmem:[%s394 + $0x8] sm:$0xff] %v1826
        %1903 = vst [vmem:[%s394 + $0x10] sm:$0xff] %v1827
        %1904 = vst [vmem:[%s394 + $0x18] sm:$0xff] %v1828
        %1905 = vst [vmem:[%s394 + $0x20] sm:$0xff] %v1829
        %1906 = vst [vmem:[%s394 + $0x28] sm:$0xff] %v1830
        %1907 = vst [vmem:[%s394 + $0x30] sm:$0xff] %v1831
        %1908 = vst [vmem:[%s394 + $0x38] sm:$0xff] %v1832
        %1909 = vst [vmem:[%s394 + $0x40] sm:$0xff] %v1833
        %1910 = vst [vmem:[%s394 + $0x48] sm:$0xff] %v1834
        %1911 = vst [vmem:[%s394 + $0x50] sm:$0xff] %v1835
        %1912 = vst [vmem:[%s394 + $0x58] sm:$0xff] %v1836
        %1913 = vst [vmem:[%s394 + $0x60] sm:$0xff] %v1837
        %1914 = vst [vmem:[%s394 + $0x68] sm:$0xff] %v1838
        %1915 = vst [vmem:[%s394 + $0x70] sm:$0xff] %v1839
        %1916 = vst [vmem:[%s394 + $0x78] sm:$0xff] %v1840
        %s1917 = sand.u32 %s210, 1
        %s1918 = scalar_lea.sflag [#allocation4], %s1917
        %s1919 = sand.u32 %s210, 1
        %s1920 = smul.addr %s1919, 128
        %s1921 = scalar_lea.vmem [#allocation3], %s1920
        %s1922 = sand.u32 %s238, 1
        %s1923 = scalar_lea.sflag [#allocation6], %s1922
        %s1924 = sand.u32 %s238, 1
        %s1925 = smul.addr %s1924, 2
        %s1926 = scalar_lea.vmem [#allocation5], %s1925
        // Predicated region
        $region45: #{tpu_custom_call.1} parent=43 // pred_check
          %p1927 = pneg %p220
        $region46: #{tpu_custom_call.1} parent=43 // pred_check_branch
          %1929 = sbr.rel (%p1927) target = $region48
        $region47: #{tpu_custom_call.1} parent=43 // pred_region
          %s1930 = smul.u32 8, %s30
          %1932 = vsyncadd %s1918, 0
          %s1933 = smul.addr %s1930, 2
          %s1934 = smul.addr %s29, 32
          %s1935 = sadd.s32 %s1933, %s1934
          %s1936 = smul.addr %s1935, 8
          %s1937 = scalar_lea.hbm %s6, %s1936
          %s1938 = sshll.u32 %s1921, 4
          %s1939 = int_to_ptr.vmem [resolvable:$true] %s1938
          %s1940 = sshll.u32 %s1937, 4
          %s1941 = int_to_ptr.hbm [resolvable:$true] %s1940
          %1946 = dma.vmem_to_hbm [thread:$0]  %s1939, 2048, %s1941, %s1918, 128, 128, 8
        $region48: #{tpu_custom_call.1} parent=43 // pred_fallthru
          _
        // Predicated region
        $region49: #{tpu_custom_call.1} parent=43 // pred_check
          %p1947 = pneg %p248
        $region50: #{tpu_custom_call.1} parent=43 // pred_check_branch
          %1949 = sbr.rel (%p1947) target = $region52
        $region51: #{tpu_custom_call.1} parent=43 // pred_region
          %1951 = vsyncadd %s1923, 0
          %s1952 = smul.addr %s29, 2
          %s1953 = sadd.s32 %s30, %s1952
          %s1954 = smul.addr %s1953, 2
          %s1955 = scalar_lea.hbm %s7, %s1954
          %s1957 = sshll.u32 %s1926, 4
          %s1958 = int_to_ptr.vmem [resolvable:$true] %s1957
          %s1959 = sshll.u32 %s1955, 4
          %s1960 = int_to_ptr.hbm [resolvable:$true] %s1959
          %1962 = dma.vmem_to_hbm [thread:$0]  %s1958, 32, %s1960, %s1923
        $region52: #{tpu_custom_call.1} parent=43 // pred_fallthru
          _
      $region44: #{tpu_custom_call.1} parent=5 // pred_fallthru
        _
      %p1963 = scmp.le.s32.totalorder 2, %s20
      // Predicated region
      $region53: #{tpu_custom_call.1} parent=5 // pred_check
        %p1964 = pneg %p1963
      $region54: #{tpu_custom_call.1} parent=5 // pred_check_branch
        %1966 = sbr.rel (%p1964) target = $region56
      $region55: #{tpu_custom_call.1} parent=5 // pred_region
        %s1967 = ssub.s32 %s20, 2
        // Predicated region
        $region57: #{tpu_custom_call.1} parent=55 // pred_check
          %p1968 = pneg %p226
        $region58: #{tpu_custom_call.1} parent=55 // pred_check_branch
          %1970 = sbr.rel (%p1968) target = $region60
        $region59: #{tpu_custom_call.1} parent=55 // pred_region
          %s1971 = sand.u32 %s211, 1
          %s1972 = scalar_lea.sflag [#allocation4], %s1971
          %s1973 = sand.u32 %s211, 1
          %s1974 = smul.addr %s1973, 128
          %s1975 = scalar_lea.vmem [#allocation3], %s1974
          %1977 = dma.done %s1972, 2048
        $region60: #{tpu_custom_call.1} parent=55 // pred_fallthru
          _
        // Predicated region
        $region61: #{tpu_custom_call.1} parent=55 // pred_check
          %p1978 = pneg %p254
        $region62: #{tpu_custom_call.1} parent=55 // pred_check_branch
          %1980 = sbr.rel (%p1978) target = $region64
        $region63: #{tpu_custom_call.1} parent=55 // pred_region
          %s1981 = sand.u32 %s239, 1
          %s1982 = scalar_lea.sflag [#allocation6], %s1981
          %s1983 = sand.u32 %s239, 1
          %s1984 = smul.addr %s1983, 2
          %s1985 = scalar_lea.vmem [#allocation5], %s1984
          %1987 = dma.done %s1982, 32
        $region64: #{tpu_custom_call.1} parent=55 // pred_fallthru
          _
      $region56: #{tpu_custom_call.1} parent=5 // pred_fallthru
        _
    $region6: #{tpu_custom_call.1} parent=1 // loop_footer
      %s24 = sadd.s32 1, %s20
    $region7: #{tpu_custom_call.1} parent=1 // loop_footer_branch
      %19 = sbr.rel target = $region3
    $region8: #{tpu_custom_call.1} parent=1 // loop_exit
      _
    %1988 = vsyncpa [#allocation4], 1
    %s1989 = scalar_lea.sflag [#allocation4], 1
    %1990 = vsyncpa %s1989, 1
    %1991 = vsyncpa [#allocation6], 1
    %s1992 = scalar_lea.sflag [#allocation6], 1
    %1993 = vsyncpa %s1992, 1

</llo_original>
